<compile_context>
chip_gen: v7x
topology: tpu7x:2x2x1
jax: 0.10.0
libtpu: 0.0.40
codegen_flags: <defaults>
</compile_context>

<pallas_src>
import jax
import jax.numpy as jnp
from jax.experimental import pallas as pl
from jax.experimental.pallas import tpu as pltpu

# ---- module-consistent (small) shapes -------------------------------------
N    = 16                   # residues / graph nodes per protein
D_LM = 24                   # synthetic LM hidden size
D_NF = 8                    # raw node-feature dim
D    = D_LM + D_NF          # node_emb_size = 32 (stands in for 1024+256=1280)
H    = int(D / 10)          # head hidden = int(node_emb_size / 10) = 3
CLS  = 2                    # cls_num

B    = 16                   # graphs per pallas_call (throughput lever: raise freely)
G    = 2                    # block-diagonal graph groups (128 nodes each)
GB   = B // G               # graphs per group = 8
GBN  = GB * N               # nodes per group  = 128
BN   = B * N                # total nodes      = 256
HP   = 8                    # lane-padded head hidden
CLSP = 128                  # lane-padded output width


# ---- Pallas kernel: 3x GraphConv (norm='both') + per-graph mean + MLP head --
def deepfri_kernel(adj_ref, x_ref, pool_ref, wbg_ref, w3b3_ref, w4b4_ref, out_ref):
    x0   = x_ref[...]                                    # [BN, D]
    pool = pool_ref[...]                                 # [B, BN]

    # Symmetric normalization materialized once per group. A is symmetric, so
    # the [1,GBN] sublane reduction and the [GBN,1] lane reduction both yield
    # the degree -- no transpose. Self-loops guarantee degree > 0 (rsqrt safe).
    def norm(adj_bf16):
        a = adj_bf16.astype(jnp.float32)                              # [GBN,GBN]
        d_row = jax.lax.rsqrt(jnp.sum(a, axis=0, keepdims=True))      # [1, GBN]
        d_col = jax.lax.rsqrt(jnp.sum(a, axis=1, keepdims=True))      # [GBN, 1]
        return a * d_col * d_row

    ahat0 = norm(adj_ref[0])
    ahat1 = norm(adj_ref[1])

    def gcn(x, layer):
        # DGL GraphConv(norm='both', weight=True, bias=True), no activation.
        wb = wbg_ref[layer]                              # [D+1, D]
        w, b = wb[0:D, :], wb[D:D + 1, :]
        agg = jnp.concatenate(
            [jnp.dot(ahat0, x[0:GBN, :],       preferred_element_type=jnp.float32),
             jnp.dot(ahat1, x[GBN:2 * GBN, :], preferred_element_type=jnp.float32)],
            axis=0)                                      # [BN, D]
        return jnp.dot(agg, w, preferred_element_type=jnp.float32) + b

    f1 = gcn(x0, 0)                                      # self.gcn
    f2 = gcn(f1, 1)                                      # self.gcn1
    f3 = gcn(f2, 2)                                      # self.gcn2

    # graph_repre = mean over each graph's nodes of concat([f1,f2,f3], dim=1):
    # one lane concat (rides the XLU slot) + one pooling matmul, then the head.
    cat = jnp.concatenate([f1, f2, f3], axis=1)          # [BN, 3D]
    g = jnp.dot(pool, cat, preferred_element_type=jnp.float32)    # [B, 3D]
    g = jnp.maximum(g, 0.0)                              # head ReLU #1

    w3 = w3b3_ref[0:3 * D, :]                            # [3D, HP] (lane-padded)
    b3 = w3b3_ref[3 * D:3 * D + 1, :]                    # [1, HP]
    h = jnp.maximum(jnp.dot(g, w3, preferred_element_type=jnp.float32) + b3, 0.0)

    w4 = w4b4_ref[0:HP, :]                               # [HP, CLSP]
    b4 = w4b4_ref[HP:HP + 1, :]                          # [1, CLSP]
    p = jnp.dot(h, w4, preferred_element_type=jnp.float32) + b4
    out_ref[...] = jnp.tanh(p)                           # Tanh -> [B, CLSP]


def deepfri_forward(adj_bd, x0_all, pool, wb_gcn, w3b3, w4b4):
    out = pl.pallas_call(
        deepfri_kernel,
        out_shape=jax.ShapeDtypeStruct((B, CLSP), jnp.float32),
        grid_spec=pltpu.PrefetchScalarGridSpec(
            num_scalar_prefetch=0,
            grid=(1,),                                   # single step: no pipeline overhead
            in_specs=[
                pl.BlockSpec((G, GBN, GBN),   lambda i: (0, 0, 0)),  # block-diag adj (bf16)
                pl.BlockSpec((BN, D),         lambda i: (0, 0)),     # node features
                pl.BlockSpec((B, BN),         lambda i: (0, 0)),     # mean-pool matrix
                pl.BlockSpec((3, D + 1, D),   lambda i: (0, 0, 0)),  # packed gcn W|b
                pl.BlockSpec((3 * D + 1, HP), lambda i: (0, 0)),     # packed head W3|b3
                pl.BlockSpec((HP + 1, CLSP),  lambda i: (0, 0)),     # packed head W4|b4
            ],
            out_specs=pl.BlockSpec((B, CLSP), lambda i: (0, 0)),
        ),
        compiler_params=pltpu.CompilerParams(
            dimension_semantics=("arbitrary",)),
        cost_estimate=pl.CostEstimate(
            flops=9_000_000, transcendentals=2_500, bytes_accessed=140_000),
    )(adj_bd, x0_all, pool, wb_gcn, w3b3, w4b4)
    return out[:, :CLS]                                  # [B, CLS]


# ---- pure-JAX reference (mirrors the PyTorch forward, post-LM, per graph) ---
def deepfri_ref(adj, x0, p):
    deg = jnp.sum(adj, axis=1, keepdims=True)
    dinv = 1.0 / jnp.sqrt(deg)
    ahat = adj * dinv * dinv.T
    f1 = ahat @ x0 @ p["w0"] + p["b0"]
    f2 = ahat @ f1 @ p["w1"] + p["b1"]
    f3 = ahat @ f2 @ p["w2"] + p["b2"]
    g = jnp.mean(jnp.concatenate([f1, f2, f3], axis=1), axis=0)
    h = jnp.maximum(g, 0.0) @ p["w3"] + p["b3"][0]
    h = jnp.maximum(h, 0.0) @ p["w4"] + p["b4"][0]
    return jnp.tanh(h)


if __name__ == "__main__":
    key = jax.random.PRNGKey(0)
    keys = jax.random.split(key, 16)

    # Synthetic frozen-LM output ([CLS] ... [SEP] -> N+2 tokens) and raw node
    # features, for B proteins.
    lm_embedding = jax.random.normal(keys[0], (B, N + 2, D_LM), jnp.float32)
    node_feat = jax.random.normal(keys[1], (B, N, D_NF), jnp.float32)

    # node_feat0 = cat([lm_embedding.squeeze(0)[1:-1, :], zeros_like(node_feat)], dim=1)
    x0_batched = jnp.concatenate(
        [lm_embedding[:, 1:-1, :], jnp.zeros_like(node_feat)], axis=-1)      # [B, N, D]
    x0_all = x0_batched.reshape(B * N, D)                                    # [BN, D]

    # Symmetric random graphs with self-loops (degrees > 0).
    upper = (jax.random.uniform(keys[2], (B, N, N)) < 0.3).astype(jnp.float32)
    upper = jnp.triu(upper, 1)
    adj_all = upper + jnp.swapaxes(upper, -1, -2) + jnp.eye(N, dtype=jnp.float32)

    # Pack GB graphs per group as one block-diagonal "super-graph"; ship bf16
    # (0/1 entries are exact) to halve the dominant HBM stream.
    adj_bd = jnp.stack([
        jax.scipy.linalg.block_diag(*[adj_all[g * GB + j] for j in range(GB)])
        for g in range(G)]).astype(jnp.bfloat16)                             # [G, GBN, GBN]

    # Per-graph mean-pool matrix, hoisted out of the kernel (tiny, loop-invariant).
    pool = jnp.repeat(jnp.eye(B, dtype=jnp.float32), N, axis=1) / N          # [B, BN]

    # Deterministic parameters (GraphConv weights/biases + head Linears).
    s = 0.1
    params = {
        "w0": s * jax.random.normal(keys[3], (D, D), jnp.float32),
        "b0": s * jax.random.normal(keys[4], (1, D), jnp.float32),
        "w1": s * jax.random.normal(keys[5], (D, D), jnp.float32),
        "b1": s * jax.random.normal(keys[6], (1, D), jnp.float32),
        "w2": s * jax.random.normal(keys[7], (D, D), jnp.float32),
        "b2": s * jax.random.normal(keys[8], (1, D), jnp.float32),
        "w3": s * jax.random.normal(keys[9], (3 * D, H), jnp.float32),
        "b3": s * jax.random.normal(keys[10], (1, H), jnp.float32),
        "w4": s * jax.random.normal(keys[11], (H, CLS), jnp.float32),
        "b4": s * jax.random.normal(keys[12], (1, CLS), jnp.float32),
    }

    # Pack parameters for the kernel:
    #   wb_gcn [3, D+1, D], w3b3 [3D+1, HP] (lane-padded), w4b4 [HP+1, CLSP].
    wb_gcn = jnp.stack([
        jnp.concatenate([params[f"w{i}"], params[f"b{i}"]], axis=0)
        for i in range(3)])
    w3b3 = jnp.concatenate([
        jnp.zeros((3 * D, HP), jnp.float32).at[:, :H].set(params["w3"]),
        jnp.zeros((1, HP), jnp.float32).at[:, :H].set(params["b3"])], axis=0)
    w4b4 = jnp.concatenate([
        jnp.zeros((HP, CLSP), jnp.float32).at[:H, :CLS].set(params["w4"]),
        jnp.zeros((1, CLSP), jnp.float32).at[:, :CLS].set(params["b4"])], axis=0)

    pred = jax.block_until_ready(
        deepfri_forward(adj_bd, x0_all, pool, wb_gcn, w3b3, w4b4))           # [B, CLS]
    ref = jax.vmap(lambda a, x: deepfri_ref(a, x, params))(adj_all, x0_batched)

    assert pred.shape == (B, CLS)
    assert jnp.allclose(pred, ref, atol=1e-4, rtol=1e-4), (pred, ref)
    print("KERNEL_OK")
</pallas_src>

<mosaic_0001>
module attributes {stable_mosaic.version = 11 : i64} {
  func.func @deepfri_kernel(%arg0: i32, %arg1: memref<2x128x128xbf16, #tpu.memory_space<vmem>>, %arg2: memref<256x32xf32, #tpu.memory_space<vmem>>, %arg3: memref<16x256xf32, #tpu.memory_space<vmem>>, %arg4: memref<3x33x32xf32, #tpu.memory_space<vmem>>, %arg5: memref<97x8xf32, #tpu.memory_space<vmem>>, %arg6: memref<9x128xf32, #tpu.memory_space<vmem>>, %arg7: memref<16x128xf32, #tpu.memory_space<vmem>>) attributes {dimension_semantics = [#tpu.dimension_semantics<arbitrary>], iteration_bounds = array<i64: 1>, scalar_prefetch = 0 : i64, scratch_operands = 0 : i64, tpu.core_type = #tpu.core_type<tc>, window_params = [{pipeline_mode = #tpu.pipeline_mode<synchronous>, transform_indices = @transform_0, window_bounds = array<i64: 2, 128, 128>}, {pipeline_mode = #tpu.pipeline_mode<synchronous>, transform_indices = @transform_1, window_bounds = array<i64: 256, 32>}, {pipeline_mode = #tpu.pipeline_mode<synchronous>, transform_indices = @transform_2, window_bounds = array<i64: 16, 256>}, {pipeline_mode = #tpu.pipeline_mode<synchronous>, transform_indices = @transform_3, window_bounds = array<i64: 3, 33, 32>}, {pipeline_mode = #tpu.pipeline_mode<synchronous>, transform_indices = @transform_4, window_bounds = array<i64: 97, 8>}, {pipeline_mode = #tpu.pipeline_mode<synchronous>, transform_indices = @transform_5, window_bounds = array<i64: 9, 128>}, {pipeline_mode = #tpu.pipeline_mode<synchronous>, transform_indices = @transform_6, window_bounds = array<i64: 16, 128>}]} {
    %c0 = arith.constant 0 : index
    %c0_0 = arith.constant 0 : index
    %0 = vector.load %arg2[%c0, %c0_0] : memref<256x32xf32, #tpu.memory_space<vmem>>, vector<256x32xf32>
    %c0_1 = arith.constant 0 : index
    %c0_2 = arith.constant 0 : index
    %1 = vector.load %arg3[%c0_1, %c0_2] : memref<16x256xf32, #tpu.memory_space<vmem>>, vector<16x256xf32>
    %c0_3 = arith.constant 0 : index
    %c0_4 = arith.constant 0 : index
    %c0_5 = arith.constant 0 : index
    %2 = vector.load %arg1[%c0_3, %c0_4, %c0_5] : memref<2x128x128xbf16, #tpu.memory_space<vmem>>, vector<1x128x128xbf16>
    %3 = vector.shape_cast %2 : vector<1x128x128xbf16> to vector<128x128xbf16>
    %4 = arith.extf %3 : vector<128x128xbf16> to vector<128x128xf32>
    %cst = arith.constant dense<0.000000e+00> : vector<128xf32>
    %5 = vector.multi_reduction <add>, %4, %cst [0] : vector<128x128xf32> to vector<128xf32>
    %6 = vector.shape_cast %5 : vector<128xf32> to vector<1x128xf32>
    %7 = math.rsqrt %6 : vector<1x128xf32>
    %cst_6 = arith.constant dense<0.000000e+00> : vector<128xf32>
    %8 = vector.multi_reduction <add>, %4, %cst_6 [1] : vector<128x128xf32> to vector<128xf32>
    %9 = vector.shape_cast %8 : vector<128xf32> to vector<128x1xf32>
    %10 = math.rsqrt %9 : vector<128x1xf32>
    %11 = vector.broadcast %10 : vector<128x1xf32> to vector<128x128xf32>
    %12 = arith.mulf %4, %11 : vector<128x128xf32>
    %13 = vector.broadcast %7 : vector<1x128xf32> to vector<128x128xf32>
    %14 = arith.mulf %12, %13 : vector<128x128xf32>
    %c1 = arith.constant 1 : index
    %c0_7 = arith.constant 0 : index
    %c0_8 = arith.constant 0 : index
    %15 = vector.load %arg1[%c1, %c0_7, %c0_8] : memref<2x128x128xbf16, #tpu.memory_space<vmem>>, vector<1x128x128xbf16>
    %16 = vector.shape_cast %15 : vector<1x128x128xbf16> to vector<128x128xbf16>
    %17 = arith.extf %16 : vector<128x128xbf16> to vector<128x128xf32>
    %cst_9 = arith.constant dense<0.000000e+00> : vector<128xf32>
    %18 = vector.multi_reduction <add>, %17, %cst_9 [0] : vector<128x128xf32> to vector<128xf32>
    %19 = vector.shape_cast %18 : vector<128xf32> to vector<1x128xf32>
    %20 = math.rsqrt %19 : vector<1x128xf32>
    %cst_10 = arith.constant dense<0.000000e+00> : vector<128xf32>
    %21 = vector.multi_reduction <add>, %17, %cst_10 [1] : vector<128x128xf32> to vector<128xf32>
    %22 = vector.shape_cast %21 : vector<128xf32> to vector<128x1xf32>
    %23 = math.rsqrt %22 : vector<128x1xf32>
    %24 = vector.broadcast %23 : vector<128x1xf32> to vector<128x128xf32>
    %25 = arith.mulf %17, %24 : vector<128x128xf32>
    %26 = vector.broadcast %20 : vector<1x128xf32> to vector<128x128xf32>
    %27 = arith.mulf %25, %26 : vector<128x128xf32>
    %c0_11 = arith.constant 0 : index
    %c0_12 = arith.constant 0 : index
    %c0_13 = arith.constant 0 : index
    %28 = vector.load %arg4[%c0_11, %c0_12, %c0_13] : memref<3x33x32xf32, #tpu.memory_space<vmem>>, vector<1x33x32xf32>
    %29 = vector.shape_cast %28 : vector<1x33x32xf32> to vector<33x32xf32>
    %30 = vector.extract_strided_slice %29 {offsets = [0, 0], sizes = [32, 32], strides = [1, 1]} : vector<33x32xf32> to vector<32x32xf32>
    %31 = vector.extract_strided_slice %29 {offsets = [32, 0], sizes = [1, 32], strides = [1, 1]} : vector<33x32xf32> to vector<1x32xf32>
    %32 = vector.extract_strided_slice %0 {offsets = [0, 0], sizes = [128, 32], strides = [1, 1]} : vector<256x32xf32> to vector<128x32xf32>
    %cst_14 = arith.constant dense<0.000000e+00> : vector<128x32xf32>
    %33 = tpu.matmul %14, %32, %cst_14 {dimension_numbers = #tpu.dot_dimension_numbers<[1], [0], [0], [1], [0, 0, 1, 1], [], []>} : vector<128x128xf32>, vector<128x32xf32>, vector<128x32xf32> -> vector<128x32xf32>
    %34 = vector.extract_strided_slice %0 {offsets = [128, 0], sizes = [128, 32], strides = [1, 1]} : vector<256x32xf32> to vector<128x32xf32>
    %cst_15 = arith.constant dense<0.000000e+00> : vector<128x32xf32>
    %35 = tpu.matmul %27, %34, %cst_15 {dimension_numbers = #tpu.dot_dimension_numbers<[1], [0], [0], [1], [0, 0, 1, 1], [], []>} : vector<128x128xf32>, vector<128x32xf32>, vector<128x32xf32> -> vector<128x32xf32>
    %36 = tpu.concatenate %33, %35 in 0 : vector<128x32xf32>, vector<128x32xf32> -> vector<256x32xf32>
    %cst_16 = arith.constant dense<0.000000e+00> : vector<256x32xf32>
    %37 = tpu.matmul %36, %30, %cst_16 {dimension_numbers = #tpu.dot_dimension_numbers<[1], [0], [0], [1], [0, 0, 1, 1], [], []>} : vector<256x32xf32>, vector<32x32xf32>, vector<256x32xf32> -> vector<256x32xf32>
    %38 = vector.broadcast %31 : vector<1x32xf32> to vector<256x32xf32>
    %39 = arith.addf %37, %38 : vector<256x32xf32>
    %c1_17 = arith.constant 1 : index
    %c0_18 = arith.constant 0 : index
    %c0_19 = arith.constant 0 : index
    %40 = vector.load %arg4[%c1_17, %c0_18, %c0_19] : memref<3x33x32xf32, #tpu.memory_space<vmem>>, vector<1x33x32xf32>
    %41 = vector.shape_cast %40 : vector<1x33x32xf32> to vector<33x32xf32>
    %42 = vector.extract_strided_slice %41 {offsets = [0, 0], sizes = [32, 32], strides = [1, 1]} : vector<33x32xf32> to vector<32x32xf32>
    %43 = vector.extract_strided_slice %41 {offsets = [32, 0], sizes = [1, 32], strides = [1, 1]} : vector<33x32xf32> to vector<1x32xf32>
    %44 = vector.extract_strided_slice %39 {offsets = [0, 0], sizes = [128, 32], strides = [1, 1]} : vector<256x32xf32> to vector<128x32xf32>
    %cst_20 = arith.constant dense<0.000000e+00> : vector<128x32xf32>
    %45 = tpu.matmul %14, %44, %cst_20 {dimension_numbers = #tpu.dot_dimension_numbers<[1], [0], [0], [1], [0, 0, 1, 1], [], []>} : vector<128x128xf32>, vector<128x32xf32>, vector<128x32xf32> -> vector<128x32xf32>
    %46 = vector.extract_strided_slice %39 {offsets = [128, 0], sizes = [128, 32], strides = [1, 1]} : vector<256x32xf32> to vector<128x32xf32>
    %cst_21 = arith.constant dense<0.000000e+00> : vector<128x32xf32>
    %47 = tpu.matmul %27, %46, %cst_21 {dimension_numbers = #tpu.dot_dimension_numbers<[1], [0], [0], [1], [0, 0, 1, 1], [], []>} : vector<128x128xf32>, vector<128x32xf32>, vector<128x32xf32> -> vector<128x32xf32>
    %48 = tpu.concatenate %45, %47 in 0 : vector<128x32xf32>, vector<128x32xf32> -> vector<256x32xf32>
    %cst_22 = arith.constant dense<0.000000e+00> : vector<256x32xf32>
    %49 = tpu.matmul %48, %42, %cst_22 {dimension_numbers = #tpu.dot_dimension_numbers<[1], [0], [0], [1], [0, 0, 1, 1], [], []>} : vector<256x32xf32>, vector<32x32xf32>, vector<256x32xf32> -> vector<256x32xf32>
    %50 = vector.broadcast %43 : vector<1x32xf32> to vector<256x32xf32>
    %51 = arith.addf %49, %50 : vector<256x32xf32>
    %c2 = arith.constant 2 : index
    %c0_23 = arith.constant 0 : index
    %c0_24 = arith.constant 0 : index
    %52 = vector.load %arg4[%c2, %c0_23, %c0_24] : memref<3x33x32xf32, #tpu.memory_space<vmem>>, vector<1x33x32xf32>
    %53 = vector.shape_cast %52 : vector<1x33x32xf32> to vector<33x32xf32>
    %54 = vector.extract_strided_slice %53 {offsets = [0, 0], sizes = [32, 32], strides = [1, 1]} : vector<33x32xf32> to vector<32x32xf32>
    %55 = vector.extract_strided_slice %53 {offsets = [32, 0], sizes = [1, 32], strides = [1, 1]} : vector<33x32xf32> to vector<1x32xf32>
    %56 = vector.extract_strided_slice %51 {offsets = [0, 0], sizes = [128, 32], strides = [1, 1]} : vector<256x32xf32> to vector<128x32xf32>
    %cst_25 = arith.constant dense<0.000000e+00> : vector<128x32xf32>
    %57 = tpu.matmul %14, %56, %cst_25 {dimension_numbers = #tpu.dot_dimension_numbers<[1], [0], [0], [1], [0, 0, 1, 1], [], []>} : vector<128x128xf32>, vector<128x32xf32>, vector<128x32xf32> -> vector<128x32xf32>
    %58 = vector.extract_strided_slice %51 {offsets = [128, 0], sizes = [128, 32], strides = [1, 1]} : vector<256x32xf32> to vector<128x32xf32>
    %cst_26 = arith.constant dense<0.000000e+00> : vector<128x32xf32>
    %59 = tpu.matmul %27, %58, %cst_26 {dimension_numbers = #tpu.dot_dimension_numbers<[1], [0], [0], [1], [0, 0, 1, 1], [], []>} : vector<128x128xf32>, vector<128x32xf32>, vector<128x32xf32> -> vector<128x32xf32>
    %60 = tpu.concatenate %57, %59 in 0 : vector<128x32xf32>, vector<128x32xf32> -> vector<256x32xf32>
    %cst_27 = arith.constant dense<0.000000e+00> : vector<256x32xf32>
    %61 = tpu.matmul %60, %54, %cst_27 {dimension_numbers = #tpu.dot_dimension_numbers<[1], [0], [0], [1], [0, 0, 1, 1], [], []>} : vector<256x32xf32>, vector<32x32xf32>, vector<256x32xf32> -> vector<256x32xf32>
    %62 = vector.broadcast %55 : vector<1x32xf32> to vector<256x32xf32>
    %63 = arith.addf %61, %62 : vector<256x32xf32>
    %64 = tpu.concatenate %39, %51, %63 in 1 : vector<256x32xf32>, vector<256x32xf32>, vector<256x32xf32> -> vector<256x96xf32>
    %cst_28 = arith.constant dense<0.000000e+00> : vector<16x96xf32>
    %65 = tpu.matmul %1, %64, %cst_28 {dimension_numbers = #tpu.dot_dimension_numbers<[1], [0], [0], [1], [0, 0, 1, 1], [], []>} : vector<16x256xf32>, vector<256x96xf32>, vector<16x96xf32> -> vector<16x96xf32>
    %cst_29 = arith.constant 0.000000e+00 : f32
    %66 = vector.broadcast %cst_29 : f32 to vector<16x96xf32>
    %67 = arith.maximumf %65, %66 : vector<16x96xf32>
    %c0_30 = arith.constant 0 : index
    %c0_31 = arith.constant 0 : index
    %68 = vector.load %arg5[%c0_30, %c0_31] : memref<97x8xf32, #tpu.memory_space<vmem>>, vector<96x8xf32>
    %c96 = arith.constant 96 : index
    %c0_32 = arith.constant 0 : index
    %69 = vector.load %arg5[%c96, %c0_32] : memref<97x8xf32, #tpu.memory_space<vmem>>, vector<1x8xf32>
    %cst_33 = arith.constant dense<0.000000e+00> : vector<16x8xf32>
    %70 = tpu.matmul %67, %68, %cst_33 {dimension_numbers = #tpu.dot_dimension_numbers<[1], [0], [0], [1], [0, 0, 1, 1], [], []>} : vector<16x96xf32>, vector<96x8xf32>, vector<16x8xf32> -> vector<16x8xf32>
    %71 = vector.broadcast %69 : vector<1x8xf32> to vector<16x8xf32>
    %72 = arith.addf %70, %71 : vector<16x8xf32>
    %cst_34 = arith.constant 0.000000e+00 : f32
    %73 = vector.broadcast %cst_34 : f32 to vector<16x8xf32>
    %74 = arith.maximumf %72, %73 : vector<16x8xf32>
    %c0_35 = arith.constant 0 : index
    %c0_36 = arith.constant 0 : index
    %75 = vector.load %arg6[%c0_35, %c0_36] : memref<9x128xf32, #tpu.memory_space<vmem>>, vector<8x128xf32>
    %c8 = arith.constant 8 : index
    %c0_37 = arith.constant 0 : index
    %76 = vector.load %arg6[%c8, %c0_37] : memref<9x128xf32, #tpu.memory_space<vmem>>, vector<1x128xf32>
    %cst_38 = arith.constant dense<0.000000e+00> : vector<16x128xf32>
    %77 = tpu.matmul %74, %75, %cst_38 {dimension_numbers = #tpu.dot_dimension_numbers<[1], [0], [0], [1], [0, 0, 1, 1], [], []>} : vector<16x8xf32>, vector<8x128xf32>, vector<16x128xf32> -> vector<16x128xf32>
    %78 = vector.broadcast %76 : vector<1x128xf32> to vector<16x128xf32>
    %79 = arith.addf %77, %78 : vector<16x128xf32>
    %80 = math.tanh %79 : vector<16x128xf32>
    %c0_39 = arith.constant 0 : index
    %c0_40 = arith.constant 0 : index
    %81 = vector.load %arg7[%c0_39, %c0_40] : memref<16x128xf32, #tpu.memory_space<vmem>>, vector<16x128xf32>
    tpu.vector_store %arg7[%c0_39, %c0_40], %80 {strides = array<i32>} : memref<16x128xf32, #tpu.memory_space<vmem>>, vector<16x128xf32>,
    return
  }
  func.func @transform_0(%arg0: i32) -> (i32, i32, i32) {
    %c0_i32 = arith.constant 0 : i32
    %c0_i32_0 = arith.constant 0 : i32
    %c0_i32_1 = arith.constant 0 : i32
    %c0_i32_2 = arith.constant 0 : i32
    return %c0_i32, %c0_i32_0, %c0_i32_1 : i32, i32, i32
  }
  func.func @transform_1(%arg0: i32) -> (i32, i32) {
    %c0_i32 = arith.constant 0 : i32
    %c0_i32_0 = arith.constant 0 : i32
    %c0_i32_1 = arith.constant 0 : i32
    return %c0_i32, %c0_i32_0 : i32, i32
  }
  func.func @transform_2(%arg0: i32) -> (i32, i32) {
    %c0_i32 = arith.constant 0 : i32
    %c0_i32_0 = arith.constant 0 : i32
    %c0_i32_1 = arith.constant 0 : i32
    return %c0_i32, %c0_i32_0 : i32, i32
  }
  func.func @transform_3(%arg0: i32) -> (i32, i32, i32) {
    %c0_i32 = arith.constant 0 : i32
    %c0_i32_0 = arith.constant 0 : i32
    %c0_i32_1 = arith.constant 0 : i32
    %c0_i32_2 = arith.constant 0 : i32
    return %c0_i32, %c0_i32_0, %c0_i32_1 : i32, i32, i32
  }
  func.func @transform_4(%arg0: i32) -> (i32, i32) {
    %c0_i32 = arith.constant 0 : i32
    %c0_i32_0 = arith.constant 0 : i32
    %c0_i32_1 = arith.constant 0 : i32
    return %c0_i32, %c0_i32_0 : i32, i32
  }
  func.func @transform_5(%arg0: i32) -> (i32, i32) {
    %c0_i32 = arith.constant 0 : i32
    %c0_i32_0 = arith.constant 0 : i32
    %c0_i32_1 = arith.constant 0 : i32
    return %c0_i32, %c0_i32_0 : i32, i32
  }
  func.func @transform_6(%arg0: i32) -> (i32, i32) {
    %c0_i32 = arith.constant 0 : i32
    %c0_i32_0 = arith.constant 0 : i32
    %c0_i32_1 = arith.constant 0 : i32
    return %c0_i32, %c0_i32_0 : i32, i32
  }
}

</mosaic_0001>

<llo_original>
// kernel: tpu_custom_call.1
$region0: #{tpu_custom_call.1}
  #allocation0 [shape = 'u32[]', space=smem, size = 0x4, offset = 0x4, fixed_abs, tag = 'smem constant byte address 0x4 - core index']
  #allocation1 [shape = 'u32[144,128]{1,0:T(1,128)}', space=vmem, size = 0x12000, scoped, tag = 'internal scratch']
  %s0 = inlined_call_operand.vmem [shape: bf16[2,128,128], index: 0, kind: input, shape index: {}]
  %s1 = inlined_call_operand.vmem [shape: f32[256,32], index: 1, kind: input, shape index: {}]
  %s2 = inlined_call_operand.vmem [shape: f32[16,256], index: 2, kind: input, shape index: {}]
  %s3 = inlined_call_operand.vmem [shape: f32[3,33,32], index: 3, kind: input, shape index: {}]
  %s4 = inlined_call_operand.vmem [shape: f32[97,8], index: 4, kind: input, shape index: {}]
  %s5 = inlined_call_operand.vmem [shape: f32[9,128], index: 5, kind: input, shape index: {}]
  %s6 = inlined_call_operand.hbm [shape: f32[16,128], index: 6, kind: output, shape index: {}]
  %s7 = sld [smem:[#allocation0]]
  $region34: #{tpu_custom_call.1} parent=0
    _
  %s9 = ssub.s32 1, %s7
  %s10 = scalar_select 0, %s9, %s7
  $region1: #{tpu_custom_call.1} parent=0
    #allocation2 [shape = 'u8[8192]{0}', space=vmem, size = 0x2000, scoped, tag = 'output window, operand 0, single buffered']
    #allocation3 [shape = 's32[1]{0}', space=sflag, size = 0x4, scoped, tag = 'scoped memory for tpu_custom_call.1']
    %11 = vsyncpa [#allocation3], 0
    // Predicated region
    $region2: #{tpu_custom_call.1} parent=1 // pred_check
      _
    $region3: #{tpu_custom_call.1} parent=1 // pred_check_branch
      %13 = sbr.rel (0) target = $region5
    $region4: #{tpu_custom_call.1} parent=1 // pred_region
      _
    $region5: #{tpu_custom_call.1} parent=1 // pred_fallthru
      _
    // Predicated region
    $region6: #{tpu_custom_call.1} parent=1 // pred_check
      _
    $region7: #{tpu_custom_call.1} parent=1 // pred_check_branch
      %15 = sbr.rel (0) target = $region9
    $region8: #{tpu_custom_call.1} parent=1 // pred_region
      _
    $region9: #{tpu_custom_call.1} parent=1 // pred_fallthru
      _
    // Predicated region
    $region10: #{tpu_custom_call.1} parent=1 // pred_check
      _
    $region11: #{tpu_custom_call.1} parent=1 // pred_check_branch
      %17 = sbr.rel (0) target = $region13
    $region12: #{tpu_custom_call.1} parent=1 // pred_region
      _
    $region13: #{tpu_custom_call.1} parent=1 // pred_fallthru
      _
    // Predicated region
    $region14: #{tpu_custom_call.1} parent=1 // pred_check
      _
    $region15: #{tpu_custom_call.1} parent=1 // pred_check_branch
      %19 = sbr.rel (0) target = $region17
    $region16: #{tpu_custom_call.1} parent=1 // pred_region
      _
    $region17: #{tpu_custom_call.1} parent=1 // pred_fallthru
      _
    // Predicated region
    $region18: #{tpu_custom_call.1} parent=1 // pred_check
      _
    $region19: #{tpu_custom_call.1} parent=1 // pred_check_branch
      %21 = sbr.rel (0) target = $region21
    $region20: #{tpu_custom_call.1} parent=1 // pred_region
      _
    $region21: #{tpu_custom_call.1} parent=1 // pred_fallthru
      _
    // Predicated region
    $region22: #{tpu_custom_call.1} parent=1 // pred_check
      _
    $region23: #{tpu_custom_call.1} parent=1 // pred_check_branch
      %23 = sbr.rel (0) target = $region25
    $region24: #{tpu_custom_call.1} parent=1 // pred_region
      _
    $region25: #{tpu_custom_call.1} parent=1 // pred_fallthru
      _
    %v24 = vld [vmem:[%s1] sm:$0xff]
    %v25 = vld [vmem:[%s1 + $0x8] sm:$0xff]
    %v26 = vld [vmem:[%s1 + $0x10] sm:$0xff]
    %v27 = vld [vmem:[%s1 + $0x18] sm:$0xff]
    %v28 = vld [vmem:[%s1 + $0x20] sm:$0xff]
    %v29 = vld [vmem:[%s1 + $0x28] sm:$0xff]
    %v30 = vld [vmem:[%s1 + $0x30] sm:$0xff]
    %v31 = vld [vmem:[%s1 + $0x38] sm:$0xff]
    %v32 = vld [vmem:[%s1 + $0x40] sm:$0xff]
    %v33 = vld [vmem:[%s1 + $0x48] sm:$0xff]
    %v34 = vld [vmem:[%s1 + $0x50] sm:$0xff]
    %v35 = vld [vmem:[%s1 + $0x58] sm:$0xff]
    %v36 = vld [vmem:[%s1 + $0x60] sm:$0xff]
    %v37 = vld [vmem:[%s1 + $0x68] sm:$0xff]
    %v38 = vld [vmem:[%s1 + $0x70] sm:$0xff]
    %v39 = vld [vmem:[%s1 + $0x78] sm:$0xff]
    %v40 = vld [vmem:[%s1 + $0x80] sm:$0xff]
    %v41 = vld [vmem:[%s1 + $0x88] sm:$0xff]
    %v42 = vld [vmem:[%s1 + $0x90] sm:$0xff]
    %v43 = vld [vmem:[%s1 + $0x98] sm:$0xff]
    %v44 = vld [vmem:[%s1 + $0xa0] sm:$0xff]
    %v45 = vld [vmem:[%s1 + $0xa8] sm:$0xff]
    %v46 = vld [vmem:[%s1 + $0xb0] sm:$0xff]
    %v47 = vld [vmem:[%s1 + $0xb8] sm:$0xff]
    %v48 = vld [vmem:[%s1 + $0xc0] sm:$0xff]
    %v49 = vld [vmem:[%s1 + $0xc8] sm:$0xff]
    %v50 = vld [vmem:[%s1 + $0xd0] sm:$0xff]
    %v51 = vld [vmem:[%s1 + $0xd8] sm:$0xff]
    %v52 = vld [vmem:[%s1 + $0xe0] sm:$0xff]
    %v53 = vld [vmem:[%s1 + $0xe8] sm:$0xff]
    %v54 = vld [vmem:[%s1 + $0xf0] sm:$0xff]
    %v55 = vld [vmem:[%s1 + $0xf8] sm:$0xff]
    %v56 = vld [vmem:[%s2] sm:$0xff]
    %v57 = vld [vmem:[%s2 + $0x8] sm:$0xff]
    %v58 = vld [vmem:[%s2 + $0x10] sm:$0xff]
    %v59 = vld [vmem:[%s2 + $0x18] sm:$0xff]
    %v60 = vld [vmem:[%s0] sm:$0xf]
    %v61 = vld [vmem:[%s0 + $0x4] sm:$0xf]
    %v62 = vld [vmem:[%s0 + $0x8] sm:$0xf]
    %v63 = vld [vmem:[%s0 + $0xc] sm:$0xf]
    %v64 = vld [vmem:[%s0 + $0x10] sm:$0xf]
    %v65 = vld [vmem:[%s0 + $0x14] sm:$0xf]
    %v66 = vld [vmem:[%s0 + $0x18] sm:$0xf]
    %v67 = vld [vmem:[%s0 + $0x1c] sm:$0xf]
    %v68 = vld [vmem:[%s0 + $0x20] sm:$0xf]
    %v69 = vld [vmem:[%s0 + $0x24] sm:$0xf]
    %v70 = vld [vmem:[%s0 + $0x28] sm:$0xf]
    %v71 = vld [vmem:[%s0 + $0x2c] sm:$0xf]
    %v72 = vld [vmem:[%s0 + $0x30] sm:$0xf]
    %v73 = vld [vmem:[%s0 + $0x34] sm:$0xf]
    %v74 = vld [vmem:[%s0 + $0x38] sm:$0xf]
    %v75 = vld [vmem:[%s0 + $0x3c] sm:$0xf]
    %v76 = vunpack.c.l.bf16 %v60
    %v77 = vunpack.c.l.bf16 %v61
    %v78 = vunpack.c.l.bf16 %v62
    %v79 = vunpack.c.l.bf16 %v63
    %v80 = vunpack.c.l.bf16 %v64
    %v81 = vunpack.c.l.bf16 %v65
    %v82 = vunpack.c.l.bf16 %v66
    %v83 = vunpack.c.l.bf16 %v67
    %v84 = vunpack.c.l.bf16 %v68
    %v85 = vunpack.c.l.bf16 %v69
    %v86 = vunpack.c.l.bf16 %v70
    %v87 = vunpack.c.l.bf16 %v71
    %v88 = vunpack.c.l.bf16 %v72
    %v89 = vunpack.c.l.bf16 %v73
    %v90 = vunpack.c.l.bf16 %v74
    %v91 = vunpack.c.l.bf16 %v75
    %v92 = vadd.f32 %v76, %v77
    %v93 = vadd.f32 %v92, %v78
    %v94 = vadd.f32 %v93, %v79
    %v95 = vadd.f32 %v94, %v80
    %v96 = vadd.f32 %v95, %v81
    %v97 = vadd.f32 %v96, %v82
    %v98 = vadd.f32 %v97, %v83
    %v99 = vadd.f32 %v98, %v84
    %v100 = vadd.f32 %v99, %v85
    %v101 = vadd.f32 %v100, %v86
    %v102 = vadd.f32 %v101, %v87
    %v103 = vadd.f32 %v102, %v88
    %v104 = vadd.f32 %v103, %v89
    %v105 = vadd.f32 %v104, %v90
    %v106 = vadd.f32 %v105, %v91
    %v107 = vrot.slane %v106, 4
    %v108 = vadd.f32 %v106, %v107
    %v109 = vrot.slane %v108, 2
    %v110 = vadd.f32 %v108, %v109
    %v111 = vrot.slane %v110, 1
    %v112 = vadd.f32 %v110, %v111
    %v113 = vrsqrt.pop %v112
    %114 = vadd.xlane.f32.xlu0 %v76
    %v115 = vpop.xlane.xlu0 %114
    %116 = vadd.xlane.f32.xlu0 %v77
    %v117 = vpop.xlane.xlu0 %116
    %118 = vadd.xlane.f32.xlu0 %v78
    %v119 = vpop.xlane.xlu0 %118
    %120 = vadd.xlane.f32.xlu0 %v79
    %v121 = vpop.xlane.xlu0 %120
    %122 = vadd.xlane.f32.xlu0 %v80
    %v123 = vpop.xlane.xlu0 %122
    %124 = vadd.xlane.f32.xlu0 %v81
    %v125 = vpop.xlane.xlu0 %124
    %126 = vadd.xlane.f32.xlu0 %v82
    %v127 = vpop.xlane.xlu0 %126
    %128 = vadd.xlane.f32.xlu0 %v83
    %v129 = vpop.xlane.xlu0 %128
    %130 = vadd.xlane.f32.xlu0 %v84
    %v131 = vpop.xlane.xlu0 %130
    %132 = vadd.xlane.f32.xlu0 %v85
    %v133 = vpop.xlane.xlu0 %132
    %134 = vadd.xlane.f32.xlu0 %v86
    %v135 = vpop.xlane.xlu0 %134
    %136 = vadd.xlane.f32.xlu0 %v87
    %v137 = vpop.xlane.xlu0 %136
    %138 = vadd.xlane.f32.xlu0 %v88
    %v139 = vpop.xlane.xlu0 %138
    %140 = vadd.xlane.f32.xlu0 %v89
    %v141 = vpop.xlane.xlu0 %140
    %142 = vadd.xlane.f32.xlu0 %v90
    %v143 = vpop.xlane.xlu0 %142
    %144 = vadd.xlane.f32.xlu0 %v91
    %v145 = vpop.xlane.xlu0 %144
    %v146 = vrsqrt.pop %v115
    %v147 = vrsqrt.pop %v117
    %v148 = vrsqrt.pop %v119
    %v149 = vrsqrt.pop %v121
    %v150 = vrsqrt.pop %v123
    %v151 = vrsqrt.pop %v125
    %v152 = vrsqrt.pop %v127
    %v153 = vrsqrt.pop %v129
    %v154 = vrsqrt.pop %v131
    %v155 = vrsqrt.pop %v133
    %v156 = vrsqrt.pop %v135
    %v157 = vrsqrt.pop %v137
    %v158 = vrsqrt.pop %v139
    %v159 = vrsqrt.pop %v141
    %v160 = vrsqrt.pop %v143
    %v161 = vrsqrt.pop %v145
    %v162 = vmul.f32 %v76, %v146
    %v163 = vmul.f32 %v77, %v147
    %v164 = vmul.f32 %v78, %v148
    %v165 = vmul.f32 %v79, %v149
    %v166 = vmul.f32 %v80, %v150
    %v167 = vmul.f32 %v81, %v151
    %v168 = vmul.f32 %v82, %v152
    %v169 = vmul.f32 %v83, %v153
    %v170 = vmul.f32 %v84, %v154
    %v171 = vmul.f32 %v85, %v155
    %v172 = vmul.f32 %v86, %v156
    %v173 = vmul.f32 %v87, %v157
    %v174 = vmul.f32 %v88, %v158
    %v175 = vmul.f32 %v89, %v159
    %v176 = vmul.f32 %v90, %v160
    %v177 = vmul.f32 %v91, %v161
    %v178 = vmul.f32 %v162, %v113
    %v179 = vmul.f32 %v163, %v113
    %v180 = vmul.f32 %v164, %v113
    %v181 = vmul.f32 %v165, %v113
    %v182 = vmul.f32 %v166, %v113
    %v183 = vmul.f32 %v167, %v113
    %v184 = vmul.f32 %v168, %v113
    %v185 = vmul.f32 %v169, %v113
    %v186 = vmul.f32 %v170, %v113
    %v187 = vmul.f32 %v171, %v113
    %v188 = vmul.f32 %v172, %v113
    %v189 = vmul.f32 %v173, %v113
    %v190 = vmul.f32 %v174, %v113
    %v191 = vmul.f32 %v175, %v113
    %v192 = vmul.f32 %v176, %v113
    %v193 = vmul.f32 %v177, %v113
    %s194 = scalar_lea.vmem %s0, 64
    %v195 = vld [vmem:[%s194] sm:$0xf]
    %v196 = vld [vmem:[%s194 + $0x4] sm:$0xf]
    %v197 = vld [vmem:[%s194 + $0x8] sm:$0xf]
    %v198 = vld [vmem:[%s194 + $0xc] sm:$0xf]
    %v199 = vld [vmem:[%s194 + $0x10] sm:$0xf]
    %v200 = vld [vmem:[%s194 + $0x14] sm:$0xf]
    %v201 = vld [vmem:[%s194 + $0x18] sm:$0xf]
    %v202 = vld [vmem:[%s194 + $0x1c] sm:$0xf]
    %v203 = vld [vmem:[%s194 + $0x20] sm:$0xf]
    %v204 = vld [vmem:[%s194 + $0x24] sm:$0xf]
    %v205 = vld [vmem:[%s194 + $0x28] sm:$0xf]
    %v206 = vld [vmem:[%s194 + $0x2c] sm:$0xf]
    %v207 = vld [vmem:[%s194 + $0x30] sm:$0xf]
    %v208 = vld [vmem:[%s194 + $0x34] sm:$0xf]
    %v209 = vld [vmem:[%s194 + $0x38] sm:$0xf]
    %v210 = vld [vmem:[%s194 + $0x3c] sm:$0xf]
    %v211 = vunpack.c.l.bf16 %v195
    %v212 = vunpack.c.l.bf16 %v196
    %v213 = vunpack.c.l.bf16 %v197
    %v214 = vunpack.c.l.bf16 %v198
    %v215 = vunpack.c.l.bf16 %v199
    %v216 = vunpack.c.l.bf16 %v200
    %v217 = vunpack.c.l.bf16 %v201
    %v218 = vunpack.c.l.bf16 %v202
    %v219 = vunpack.c.l.bf16 %v203
    %v220 = vunpack.c.l.bf16 %v204
    %v221 = vunpack.c.l.bf16 %v205
    %v222 = vunpack.c.l.bf16 %v206
    %v223 = vunpack.c.l.bf16 %v207
    %v224 = vunpack.c.l.bf16 %v208
    %v225 = vunpack.c.l.bf16 %v209
    %v226 = vunpack.c.l.bf16 %v210
    %v227 = vadd.f32 %v211, %v212
    %v228 = vadd.f32 %v227, %v213
    %v229 = vadd.f32 %v228, %v214
    %v230 = vadd.f32 %v229, %v215
    %v231 = vadd.f32 %v230, %v216
    %v232 = vadd.f32 %v231, %v217
    %v233 = vadd.f32 %v232, %v218
    %v234 = vadd.f32 %v233, %v219
    %v235 = vadd.f32 %v234, %v220
    %v236 = vadd.f32 %v235, %v221
    %v237 = vadd.f32 %v236, %v222
    %v238 = vadd.f32 %v237, %v223
    %v239 = vadd.f32 %v238, %v224
    %v240 = vadd.f32 %v239, %v225
    %v241 = vadd.f32 %v240, %v226
    %v242 = vrot.slane %v241, 4
    %v243 = vadd.f32 %v241, %v242
    %v244 = vrot.slane %v243, 2
    %v245 = vadd.f32 %v243, %v244
    %v246 = vrot.slane %v245, 1
    %v247 = vadd.f32 %v245, %v246
    %v248 = vrsqrt.pop %v247
    %249 = vadd.xlane.f32.xlu0 %v211
    %v250 = vpop.xlane.xlu0 %249
    %251 = vadd.xlane.f32.xlu0 %v212
    %v252 = vpop.xlane.xlu0 %251
    %253 = vadd.xlane.f32.xlu0 %v213
    %v254 = vpop.xlane.xlu0 %253
    %255 = vadd.xlane.f32.xlu0 %v214
    %v256 = vpop.xlane.xlu0 %255
    %257 = vadd.xlane.f32.xlu0 %v215
    %v258 = vpop.xlane.xlu0 %257
    %259 = vadd.xlane.f32.xlu0 %v216
    %v260 = vpop.xlane.xlu0 %259
    %261 = vadd.xlane.f32.xlu0 %v217
    %v262 = vpop.xlane.xlu0 %261
    %263 = vadd.xlane.f32.xlu0 %v218
    %v264 = vpop.xlane.xlu0 %263
    %265 = vadd.xlane.f32.xlu0 %v219
    %v266 = vpop.xlane.xlu0 %265
    %267 = vadd.xlane.f32.xlu0 %v220
    %v268 = vpop.xlane.xlu0 %267
    %269 = vadd.xlane.f32.xlu0 %v221
    %v270 = vpop.xlane.xlu0 %269
    %271 = vadd.xlane.f32.xlu0 %v222
    %v272 = vpop.xlane.xlu0 %271
    %273 = vadd.xlane.f32.xlu0 %v223
    %v274 = vpop.xlane.xlu0 %273
    %275 = vadd.xlane.f32.xlu0 %v224
    %v276 = vpop.xlane.xlu0 %275
    %277 = vadd.xlane.f32.xlu0 %v225
    %v278 = vpop.xlane.xlu0 %277
    %279 = vadd.xlane.f32.xlu0 %v226
    %v280 = vpop.xlane.xlu0 %279
    %v281 = vrsqrt.pop %v250
    %v282 = vrsqrt.pop %v252
    %v283 = vrsqrt.pop %v254
    %v284 = vrsqrt.pop %v256
    %v285 = vrsqrt.pop %v258
    %v286 = vrsqrt.pop %v260
    %v287 = vrsqrt.pop %v262
    %v288 = vrsqrt.pop %v264
    %v289 = vrsqrt.pop %v266
    %v290 = vrsqrt.pop %v268
    %v291 = vrsqrt.pop %v270
    %v292 = vrsqrt.pop %v272
    %v293 = vrsqrt.pop %v274
    %v294 = vrsqrt.pop %v276
    %v295 = vrsqrt.pop %v278
    %v296 = vrsqrt.pop %v280
    %v297 = vmul.f32 %v211, %v281
    %v298 = vmul.f32 %v212, %v282
    %v299 = vmul.f32 %v213, %v283
    %v300 = vmul.f32 %v214, %v284
    %v301 = vmul.f32 %v215, %v285
    %v302 = vmul.f32 %v216, %v286
    %v303 = vmul.f32 %v217, %v287
    %v304 = vmul.f32 %v218, %v288
    %v305 = vmul.f32 %v219, %v289
    %v306 = vmul.f32 %v220, %v290
    %v307 = vmul.f32 %v221, %v291
    %v308 = vmul.f32 %v222, %v292
    %v309 = vmul.f32 %v223, %v293
    %v310 = vmul.f32 %v224, %v294
    %v311 = vmul.f32 %v225, %v295
    %v312 = vmul.f32 %v226, %v296
    %v313 = vmul.f32 %v297, %v248
    %v314 = vmul.f32 %v298, %v248
    %v315 = vmul.f32 %v299, %v248
    %v316 = vmul.f32 %v300, %v248
    %v317 = vmul.f32 %v301, %v248
    %v318 = vmul.f32 %v302, %v248
    %v319 = vmul.f32 %v303, %v248
    %v320 = vmul.f32 %v304, %v248
    %v321 = vmul.f32 %v305, %v248
    %v322 = vmul.f32 %v306, %v248
    %v323 = vmul.f32 %v307, %v248
    %v324 = vmul.f32 %v308, %v248
    %v325 = vmul.f32 %v309, %v248
    %v326 = vmul.f32 %v310, %v248
    %v327 = vmul.f32 %v311, %v248
    %v328 = vmul.f32 %v312, %v248
    %v329 = vld [vmem:[%s3] sm:$0xff]
    %v330 = vld [vmem:[%s3 + $0x8] sm:$0xff]
    %v331 = vld [vmem:[%s3 + $0x10] sm:$0xff]
    %v332 = vld [vmem:[%s3 + $0x18] sm:$0xff]
    %v333 = vld [vmem:[%s3 + $0x20] sm:$0x1]
    %334 = vmatprep.subr.mxu0 0.0
    %335 = vmatpush1.msra.mxu0 %v24
    %336 = vmatprep.subr.mxu0 0.0
    %337 = vmatpush1.msra.mxu0 %v25
    %338 = vmatprep.subr.mxu0 0.0
    %339 = vmatpush1.msra.mxu0 %v26
    %340 = vmatprep.subr.mxu0 0.0
    %341 = vmatpush1.msra.mxu0 %v27
    %342 = vmatprep.subr.mxu0 0.0
    %343 = vmatpush1.msra.mxu0 %v28
    %344 = vmatprep.subr.mxu0 0.0
    %345 = vmatpush1.msra.mxu0 %v29
    %346 = vmatprep.subr.mxu0 0.0
    %347 = vmatpush1.msra.mxu0 %v30
    %348 = vmatprep.subr.mxu0 0.0
    %349 = vmatpush1.msra.mxu0 %v31
    %350 = vmatprep.subr.mxu0 0.0
    %351 = vmatpush1.msra.mxu0 %v32
    %352 = vmatprep.subr.mxu0 0.0
    %353 = vmatpush1.msra.mxu0 %v33
    %354 = vmatprep.subr.mxu0 0.0
    %355 = vmatpush1.msra.mxu0 %v34
    %356 = vmatprep.subr.mxu0 0.0
    %357 = vmatpush1.msra.mxu0 %v35
    %358 = vmatprep.subr.mxu0 0.0
    %359 = vmatpush1.msra.mxu0 %v36
    %360 = vmatprep.subr.mxu0 0.0
    %361 = vmatpush1.msra.mxu0 %v37
    %362 = vmatprep.subr.mxu0 0.0
    %363 = vmatpush1.msra.mxu0 %v38
    %364 = vmatprep.subr.mxu0 0.0
    %365 = vmatpush1.msra.mxu0 %v39
    %366 = vmatprep.subr.mxu0 0.0
    %367 = vmatpush1.msra.mxu0 0.0
    %368 = vmatprep.subr.mxu0 0.0
    %369 = vmatpush1.msra.mxu0 0.0
    %370 = vmatprep.subr.mxu0 0.0
    %371 = vmatpush1.msra.mxu0 0.0
    %372 = vmatprep.subr.mxu0 0.0
    %373 = vmatpush1.msra.mxu0 0.0
    %374 = vmatprep.subr.mxu0 0.0
    %375 = vmatpush1.msra.mxu0 0.0
    %376 = vmatprep.subr.mxu0 0.0
    %377 = vmatpush1.msra.mxu0 0.0
    %378 = vmatprep.subr.mxu0 0.0
    %379 = vmatpush1.msra.mxu0 0.0
    %380 = vmatprep.subr.mxu0 0.0
    %381 = vmatpush1.msra.mxu0 0.0
    %382 = vmatprep.subr.mxu0 0.0
    %383 = vmatpush1.msra.mxu0 0.0
    %384 = vmatprep.subr.mxu0 0.0
    %385 = vmatpush1.msra.mxu0 0.0
    %386 = vmatprep.subr.mxu0 0.0
    %387 = vmatpush1.msra.mxu0 0.0
    %388 = vmatprep.subr.mxu0 0.0
    %389 = vmatpush1.msra.mxu0 0.0
    %390 = vmatprep.subr.mxu0 0.0
    %391 = vmatpush1.msra.mxu0 0.0
    %392 = vmatprep.subr.mxu0 0.0
    %393 = vmatpush1.msra.mxu0 0.0
    %394 = vmatprep.subr.mxu0 0.0
    %395 = vmatpush1.msra.mxu0 0.0
    %396 = vmatprep.subr.mxu0 0.0
    %397 = vmatpush1.msra.mxu0 0.0
    %398 = vmatprep.mubr.f32.mxu0 0.0
    %399 = vmatmul.mubr.f32.gmra.mrb[0].mxu0 %v178
    %v400 = vpop.f32.mrb[0].mxu0
    %v401 = vadd.f32 0.0, %v400
    %v402 = vpop.f32.mrb[0].mxu0
    %403 = vmatprep.mubr.f32.mxu0 0.0
    %404 = vmatmul.mubr.f32.gmra.mrb[0].mxu0 %v179
    %v405 = vpop.f32.mrb[0].mxu0
    %v406 = vadd.f32 0.0, %v405
    %v407 = vpop.f32.mrb[0].mxu0
    %408 = vmatprep.mubr.f32.mxu0 0.0
    %409 = vmatmul.mubr.f32.gmra.mrb[0].mxu0 %v180
    %v410 = vpop.f32.mrb[0].mxu0
    %v411 = vadd.f32 0.0, %v410
    %v412 = vpop.f32.mrb[0].mxu0
    %413 = vmatprep.mubr.f32.mxu0 0.0
    %414 = vmatmul.mubr.f32.gmra.mrb[0].mxu0 %v181
    %v415 = vpop.f32.mrb[0].mxu0
    %v416 = vadd.f32 0.0, %v415
    %v417 = vpop.f32.mrb[0].mxu0
    %418 = vmatprep.mubr.f32.mxu0 0.0
    %419 = vmatmul.mubr.f32.gmra.mrb[0].mxu0 %v182
    %v420 = vpop.f32.mrb[0].mxu0
    %v421 = vadd.f32 0.0, %v420
    %v422 = vpop.f32.mrb[0].mxu0
    %423 = vmatprep.mubr.f32.mxu0 0.0
    %424 = vmatmul.mubr.f32.gmra.mrb[0].mxu0 %v183
    %v425 = vpop.f32.mrb[0].mxu0
    %v426 = vadd.f32 0.0, %v425
    %v427 = vpop.f32.mrb[0].mxu0
    %428 = vmatprep.mubr.f32.mxu0 0.0
    %429 = vmatmul.mubr.f32.gmra.mrb[0].mxu0 %v184
    %v430 = vpop.f32.mrb[0].mxu0
    %v431 = vadd.f32 0.0, %v430
    %v432 = vpop.f32.mrb[0].mxu0
    %433 = vmatprep.mubr.f32.mxu0 0.0
    %434 = vmatmul.mubr.f32.gmra.mrb[0].mxu0 %v185
    %v435 = vpop.f32.mrb[0].mxu0
    %v436 = vadd.f32 0.0, %v435
    %v437 = vpop.f32.mrb[0].mxu0
    %438 = vmatprep.mubr.f32.mxu0 0.0
    %439 = vmatmul.mubr.f32.gmra.mrb[0].mxu0 %v186
    %v440 = vpop.f32.mrb[0].mxu0
    %v441 = vadd.f32 0.0, %v440
    %v442 = vpop.f32.mrb[0].mxu0
    %443 = vmatprep.mubr.f32.mxu0 0.0
    %444 = vmatmul.mubr.f32.gmra.mrb[0].mxu0 %v187
    %v445 = vpop.f32.mrb[0].mxu0
    %v446 = vadd.f32 0.0, %v445
    %v447 = vpop.f32.mrb[0].mxu0
    %448 = vmatprep.mubr.f32.mxu0 0.0
    %449 = vmatmul.mubr.f32.gmra.mrb[0].mxu0 %v188
    %v450 = vpop.f32.mrb[0].mxu0
    %v451 = vadd.f32 0.0, %v450
    %v452 = vpop.f32.mrb[0].mxu0
    %453 = vmatprep.mubr.f32.mxu0 0.0
    %454 = vmatmul.mubr.f32.gmra.mrb[0].mxu0 %v189
    %v455 = vpop.f32.mrb[0].mxu0
    %v456 = vadd.f32 0.0, %v455
    %v457 = vpop.f32.mrb[0].mxu0
    %458 = vmatprep.mubr.f32.mxu0 0.0
    %459 = vmatmul.mubr.f32.gmra.mrb[0].mxu0 %v190
    %v460 = vpop.f32.mrb[0].mxu0
    %v461 = vadd.f32 0.0, %v460
    %v462 = vpop.f32.mrb[0].mxu0
    %463 = vmatprep.mubr.f32.mxu0 0.0
    %464 = vmatmul.mubr.f32.gmra.mrb[0].mxu0 %v191
    %v465 = vpop.f32.mrb[0].mxu0
    %v466 = vadd.f32 0.0, %v465
    %v467 = vpop.f32.mrb[0].mxu0
    %468 = vmatprep.mubr.f32.mxu0 0.0
    %469 = vmatmul.mubr.f32.gmra.mrb[0].mxu0 %v192
    %v470 = vpop.f32.mrb[0].mxu0
    %v471 = vadd.f32 0.0, %v470
    %v472 = vpop.f32.mrb[0].mxu0
    %473 = vmatprep.mubr.f32.mxu0 0.0
    %474 = vmatmul.mubr.f32.gmra.mrb[0].mxu0 %v193
    %v475 = vpop.f32.mrb[0].mxu0
    %v476 = vadd.f32 0.0, %v475
    %v477 = vpop.f32.mrb[0].mxu0
    %478 = vdwg.mxu0
    %479 = vmatprep.subr.mxu0 0.0
    %480 = vmatpush1.msra.mxu0 %v40
    %481 = vmatprep.subr.mxu0 0.0
    %482 = vmatpush1.msra.mxu0 %v41
    %483 = vmatprep.subr.mxu0 0.0
    %484 = vmatpush1.msra.mxu0 %v42
    %485 = vmatprep.subr.mxu0 0.0
    %486 = vmatpush1.msra.mxu0 %v43
    %487 = vmatprep.subr.mxu0 0.0
    %488 = vmatpush1.msra.mxu0 %v44
    %489 = vmatprep.subr.mxu0 0.0
    %490 = vmatpush1.msra.mxu0 %v45
    %491 = vmatprep.subr.mxu0 0.0
    %492 = vmatpush1.msra.mxu0 %v46
    %493 = vmatprep.subr.mxu0 0.0
    %494 = vmatpush1.msra.mxu0 %v47
    %495 = vmatprep.subr.mxu0 0.0
    %496 = vmatpush1.msra.mxu0 %v48
    %497 = vmatprep.subr.mxu0 0.0
    %498 = vmatpush1.msra.mxu0 %v49
    %499 = vmatprep.subr.mxu0 0.0
    %500 = vmatpush1.msra.mxu0 %v50
    %501 = vmatprep.subr.mxu0 0.0
    %502 = vmatpush1.msra.mxu0 %v51
    %503 = vmatprep.subr.mxu0 0.0
    %504 = vmatpush1.msra.mxu0 %v52
    %505 = vmatprep.subr.mxu0 0.0
    %506 = vmatpush1.msra.mxu0 %v53
    %507 = vmatprep.subr.mxu0 0.0
    %508 = vmatpush1.msra.mxu0 %v54
    %509 = vmatprep.subr.mxu0 0.0
    %510 = vmatpush1.msra.mxu0 %v55
    %511 = vmatprep.subr.mxu0 0.0
    %512 = vmatpush1.msra.mxu0 0.0
    %513 = vmatprep.subr.mxu0 0.0
    %514 = vmatpush1.msra.mxu0 0.0
    %515 = vmatprep.subr.mxu0 0.0
    %516 = vmatpush1.msra.mxu0 0.0
    %517 = vmatprep.subr.mxu0 0.0
    %518 = vmatpush1.msra.mxu0 0.0
    %519 = vmatprep.subr.mxu0 0.0
    %520 = vmatpush1.msra.mxu0 0.0
    %521 = vmatprep.subr.mxu0 0.0
    %522 = vmatpush1.msra.mxu0 0.0
    %523 = vmatprep.subr.mxu0 0.0
    %524 = vmatpush1.msra.mxu0 0.0
    %525 = vmatprep.subr.mxu0 0.0
    %526 = vmatpush1.msra.mxu0 0.0
    %527 = vmatprep.subr.mxu0 0.0
    %528 = vmatpush1.msra.mxu0 0.0
    %529 = vmatprep.subr.mxu0 0.0
    %530 = vmatpush1.msra.mxu0 0.0
    %531 = vmatprep.subr.mxu0 0.0
    %532 = vmatpush1.msra.mxu0 0.0
    %533 = vmatprep.subr.mxu0 0.0
    %534 = vmatpush1.msra.mxu0 0.0
    %535 = vmatprep.subr.mxu0 0.0
    %536 = vmatpush1.msra.mxu0 0.0
    %537 = vmatprep.subr.mxu0 0.0
    %538 = vmatpush1.msra.mxu0 0.0
    %539 = vmatprep.subr.mxu0 0.0
    %540 = vmatpush1.msra.mxu0 0.0
    %541 = vmatprep.subr.mxu0 0.0
    %542 = vmatpush1.msra.mxu0 0.0
    %543 = vmatprep.mubr.f32.mxu0 0.0
    %544 = vmatmul.mubr.f32.gmra.mrb[0].mxu0 %v313
    %v545 = vpop.f32.mrb[0].mxu0
    %v546 = vadd.f32 0.0, %v545
    %v547 = vpop.f32.mrb[0].mxu0
    %548 = vmatprep.mubr.f32.mxu0 0.0
    %549 = vmatmul.mubr.f32.gmra.mrb[0].mxu0 %v314
    %v550 = vpop.f32.mrb[0].mxu0
    %v551 = vadd.f32 0.0, %v550
    %v552 = vpop.f32.mrb[0].mxu0
    %553 = vmatprep.mubr.f32.mxu0 0.0
    %554 = vmatmul.mubr.f32.gmra.mrb[0].mxu0 %v315
    %v555 = vpop.f32.mrb[0].mxu0
    %v556 = vadd.f32 0.0, %v555
    %v557 = vpop.f32.mrb[0].mxu0
    %558 = vmatprep.mubr.f32.mxu0 0.0
    %559 = vmatmul.mubr.f32.gmra.mrb[0].mxu0 %v316
    %v560 = vpop.f32.mrb[0].mxu0
    %v561 = vadd.f32 0.0, %v560
    %v562 = vpop.f32.mrb[0].mxu0
    %563 = vmatprep.mubr.f32.mxu0 0.0
    %564 = vmatmul.mubr.f32.gmra.mrb[0].mxu0 %v317
    %v565 = vpop.f32.mrb[0].mxu0
    %v566 = vadd.f32 0.0, %v565
    %v567 = vpop.f32.mrb[0].mxu0
    %568 = vmatprep.mubr.f32.mxu0 0.0
    %569 = vmatmul.mubr.f32.gmra.mrb[0].mxu0 %v318
    %v570 = vpop.f32.mrb[0].mxu0
    %v571 = vadd.f32 0.0, %v570
    %v572 = vpop.f32.mrb[0].mxu0
    %573 = vmatprep.mubr.f32.mxu0 0.0
    %574 = vmatmul.mubr.f32.gmra.mrb[0].mxu0 %v319
    %v575 = vpop.f32.mrb[0].mxu0
    %v576 = vadd.f32 0.0, %v575
    %v577 = vpop.f32.mrb[0].mxu0
    %578 = vmatprep.mubr.f32.mxu0 0.0
    %579 = vmatmul.mubr.f32.gmra.mrb[0].mxu0 %v320
    %v580 = vpop.f32.mrb[0].mxu0
    %v581 = vadd.f32 0.0, %v580
    %v582 = vpop.f32.mrb[0].mxu0
    %583 = vmatprep.mubr.f32.mxu0 0.0
    %584 = vmatmul.mubr.f32.gmra.mrb[0].mxu0 %v321
    %v585 = vpop.f32.mrb[0].mxu0
    %v586 = vadd.f32 0.0, %v585
    %v587 = vpop.f32.mrb[0].mxu0
    %588 = vmatprep.mubr.f32.mxu0 0.0
    %589 = vmatmul.mubr.f32.gmra.mrb[0].mxu0 %v322
    %v590 = vpop.f32.mrb[0].mxu0
    %v591 = vadd.f32 0.0, %v590
    %v592 = vpop.f32.mrb[0].mxu0
    %593 = vmatprep.mubr.f32.mxu0 0.0
    %594 = vmatmul.mubr.f32.gmra.mrb[0].mxu0 %v323
    %v595 = vpop.f32.mrb[0].mxu0
    %v596 = vadd.f32 0.0, %v595
    %v597 = vpop.f32.mrb[0].mxu0
    %598 = vmatprep.mubr.f32.mxu0 0.0
    %599 = vmatmul.mubr.f32.gmra.mrb[0].mxu0 %v324
    %v600 = vpop.f32.mrb[0].mxu0
    %v601 = vadd.f32 0.0, %v600
    %v602 = vpop.f32.mrb[0].mxu0
    %603 = vmatprep.mubr.f32.mxu0 0.0
    %604 = vmatmul.mubr.f32.gmra.mrb[0].mxu0 %v325
    %v605 = vpop.f32.mrb[0].mxu0
    %v606 = vadd.f32 0.0, %v605
    %v607 = vpop.f32.mrb[0].mxu0
    %608 = vmatprep.mubr.f32.mxu0 0.0
    %609 = vmatmul.mubr.f32.gmra.mrb[0].mxu0 %v326
    %v610 = vpop.f32.mrb[0].mxu0
    %v611 = vadd.f32 0.0, %v610
    %v612 = vpop.f32.mrb[0].mxu0
    %613 = vmatprep.mubr.f32.mxu0 0.0
    %614 = vmatmul.mubr.f32.gmra.mrb[0].mxu0 %v327
    %v615 = vpop.f32.mrb[0].mxu0
    %v616 = vadd.f32 0.0, %v615
    %v617 = vpop.f32.mrb[0].mxu0
    %618 = vmatprep.mubr.f32.mxu0 0.0
    %619 = vmatmul.mubr.f32.gmra.mrb[0].mxu0 %v328
    %v620 = vpop.f32.mrb[0].mxu0
    %v621 = vadd.f32 0.0, %v620
    %v622 = vpop.f32.mrb[0].mxu0
    %623 = vdwg.mxu0
    %v624 = vlaneseq
    %v625 = vshrl.u32 %v624, 7
    %v626 = vsub.s32 0, %v625
    %v627 = vrot.slane %v333, %v626
    %vm628 = vcmask 261120
    %v630 = vsel %vm628, %v401, 0
    %v633 = vsel %vm628, %v406, 0
    %v636 = vsel %vm628, %v411, 0
    %v639 = vsel %vm628, %v416, 0
    %v642 = vsel %vm628, %v421, 0
    %v645 = vsel %vm628, %v426, 0
    %v648 = vsel %vm628, %v431, 0
    %v651 = vsel %vm628, %v436, 0
    %v654 = vsel %vm628, %v441, 0
    %v657 = vsel %vm628, %v446, 0
    %v660 = vsel %vm628, %v451, 0
    %v663 = vsel %vm628, %v456, 0
    %v666 = vsel %vm628, %v461, 0
    %v669 = vsel %vm628, %v466, 0
    %v672 = vsel %vm628, %v471, 0
    %v675 = vsel %vm628, %v476, 0
    %v678 = vsel %vm628, %v546, 0
    %v681 = vsel %vm628, %v551, 0
    %v684 = vsel %vm628, %v556, 0
    %v687 = vsel %vm628, %v561, 0
    %v690 = vsel %vm628, %v566, 0
    %v693 = vsel %vm628, %v571, 0
    %v696 = vsel %vm628, %v576, 0
    %v699 = vsel %vm628, %v581, 0
    %v702 = vsel %vm628, %v586, 0
    %v705 = vsel %vm628, %v591, 0
    %v708 = vsel %vm628, %v596, 0
    %v711 = vsel %vm628, %v601, 0
    %v714 = vsel %vm628, %v606, 0
    %v717 = vsel %vm628, %v611, 0
    %v720 = vsel %vm628, %v616, 0
    %v723 = vsel %vm628, %v621, 0
    %725 = vmatprep.subr.mxu0 0.0
    %726 = vmatpush1.msra.mxu0 %v329
    %727 = vmatprep.subr.mxu0 0.0
    %728 = vmatpush1.msra.mxu0 %v330
    %729 = vmatprep.subr.mxu0 0.0
    %730 = vmatpush1.msra.mxu0 %v331
    %731 = vmatprep.subr.mxu0 0.0
    %732 = vmatpush1.msra.mxu0 %v332
    %733 = vmatprep.subr.mxu0 0.0
    %734 = vmatpush1.msra.mxu0 0.0
    %735 = vmatprep.subr.mxu0 0.0
    %736 = vmatpush1.msra.mxu0 0.0
    %737 = vmatprep.subr.mxu0 0.0
    %738 = vmatpush1.msra.mxu0 0.0
    %739 = vmatprep.subr.mxu0 0.0
    %740 = vmatpush1.msra.mxu0 0.0
    %741 = vmatprep.subr.mxu0 0.0
    %742 = vmatpush1.msra.mxu0 0.0
    %743 = vmatprep.subr.mxu0 0.0
    %744 = vmatpush1.msra.mxu0 0.0
    %745 = vmatprep.subr.mxu0 0.0
    %746 = vmatpush1.msra.mxu0 0.0
    %747 = vmatprep.subr.mxu0 0.0
    %748 = vmatpush1.msra.mxu0 0.0
    %749 = vmatprep.subr.mxu0 0.0
    %750 = vmatpush1.msra.mxu0 0.0
    %751 = vmatprep.subr.mxu0 0.0
    %752 = vmatpush1.msra.mxu0 0.0
    %753 = vmatprep.subr.mxu0 0.0
    %754 = vmatpush1.msra.mxu0 0.0
    %755 = vmatprep.subr.mxu0 0.0
    %756 = vmatpush1.msra.mxu0 0.0
    %757 = vmatprep.subr.mxu0 0.0
    %758 = vmatpush1.msra.mxu0 0.0
    %759 = vmatprep.subr.mxu0 0.0
    %760 = vmatpush1.msra.mxu0 0.0
    %761 = vmatprep.subr.mxu0 0.0
    %762 = vmatpush1.msra.mxu0 0.0
    %763 = vmatprep.subr.mxu0 0.0
    %764 = vmatpush1.msra.mxu0 0.0
    %765 = vmatprep.subr.mxu0 0.0
    %766 = vmatpush1.msra.mxu0 0.0
    %767 = vmatprep.subr.mxu0 0.0
    %768 = vmatpush1.msra.mxu0 0.0
    %769 = vmatprep.subr.mxu0 0.0
    %770 = vmatpush1.msra.mxu0 0.0
    %771 = vmatprep.subr.mxu0 0.0
    %772 = vmatpush1.msra.mxu0 0.0
    %773 = vmatprep.subr.mxu0 0.0
    %774 = vmatpush1.msra.mxu0 0.0
    %775 = vmatprep.subr.mxu0 0.0
    %776 = vmatpush1.msra.mxu0 0.0
    %777 = vmatprep.subr.mxu0 0.0
    %778 = vmatpush1.msra.mxu0 0.0
    %779 = vmatprep.subr.mxu0 0.0
    %780 = vmatpush1.msra.mxu0 0.0
    %781 = vmatprep.subr.mxu0 0.0
    %782 = vmatpush1.msra.mxu0 0.0
    %783 = vmatprep.subr.mxu0 0.0
    %784 = vmatpush1.msra.mxu0 0.0
    %785 = vmatprep.subr.mxu0 0.0
    %786 = vmatpush1.msra.mxu0 0.0
    %787 = vmatprep.subr.mxu0 0.0
    %788 = vmatpush1.msra.mxu0 0.0
    %789 = vmatprep.mubr.f32.mxu0 0.0
    %790 = vmatmul.mubr.f32.gmra.mrb[0].mxu0 %v630
    %v791 = vpop.f32.mrb[0].mxu0
    %v792 = vadd.f32 %v627, %v791
    %v793 = vpop.f32.mrb[0].mxu0
    %794 = vmatprep.mubr.f32.mxu0 0.0
    %795 = vmatmul.mubr.f32.gmra.mrb[0].mxu0 %v633
    %v796 = vpop.f32.mrb[0].mxu0
    %v797 = vadd.f32 %v627, %v796
    %v798 = vpop.f32.mrb[0].mxu0
    %799 = vmatprep.mubr.f32.mxu0 0.0
    %800 = vmatmul.mubr.f32.gmra.mrb[0].mxu0 %v636
    %v801 = vpop.f32.mrb[0].mxu0
    %v802 = vadd.f32 %v627, %v801
    %v803 = vpop.f32.mrb[0].mxu0
    %804 = vmatprep.mubr.f32.mxu0 0.0
    %805 = vmatmul.mubr.f32.gmra.mrb[0].mxu0 %v639
    %v806 = vpop.f32.mrb[0].mxu0
    %v807 = vadd.f32 %v627, %v806
    %v808 = vpop.f32.mrb[0].mxu0
    %809 = vmatprep.mubr.f32.mxu0 0.0
    %810 = vmatmul.mubr.f32.gmra.mrb[0].mxu0 %v642
    %v811 = vpop.f32.mrb[0].mxu0
    %v812 = vadd.f32 %v627, %v811
    %v813 = vpop.f32.mrb[0].mxu0
    %814 = vmatprep.mubr.f32.mxu0 0.0
    %815 = vmatmul.mubr.f32.gmra.mrb[0].mxu0 %v645
    %v816 = vpop.f32.mrb[0].mxu0
    %v817 = vadd.f32 %v627, %v816
    %v818 = vpop.f32.mrb[0].mxu0
    %819 = vmatprep.mubr.f32.mxu0 0.0
    %820 = vmatmul.mubr.f32.gmra.mrb[0].mxu0 %v648
    %v821 = vpop.f32.mrb[0].mxu0
    %v822 = vadd.f32 %v627, %v821
    %v823 = vpop.f32.mrb[0].mxu0
    %824 = vmatprep.mubr.f32.mxu0 0.0
    %825 = vmatmul.mubr.f32.gmra.mrb[0].mxu0 %v651
    %v826 = vpop.f32.mrb[0].mxu0
    %v827 = vadd.f32 %v627, %v826
    %v828 = vpop.f32.mrb[0].mxu0
    %829 = vmatprep.mubr.f32.mxu0 0.0
    %830 = vmatmul.mubr.f32.gmra.mrb[0].mxu0 %v654
    %v831 = vpop.f32.mrb[0].mxu0
    %v832 = vadd.f32 %v627, %v831
    %v833 = vpop.f32.mrb[0].mxu0
    %834 = vmatprep.mubr.f32.mxu0 0.0
    %835 = vmatmul.mubr.f32.gmra.mrb[0].mxu0 %v657
    %v836 = vpop.f32.mrb[0].mxu0
    %v837 = vadd.f32 %v627, %v836
    %v838 = vpop.f32.mrb[0].mxu0
    %839 = vmatprep.mubr.f32.mxu0 0.0
    %840 = vmatmul.mubr.f32.gmra.mrb[0].mxu0 %v660
    %v841 = vpop.f32.mrb[0].mxu0
    %v842 = vadd.f32 %v627, %v841
    %v843 = vpop.f32.mrb[0].mxu0
    %844 = vmatprep.mubr.f32.mxu0 0.0
    %845 = vmatmul.mubr.f32.gmra.mrb[0].mxu0 %v663
    %v846 = vpop.f32.mrb[0].mxu0
    %v847 = vadd.f32 %v627, %v846
    %v848 = vpop.f32.mrb[0].mxu0
    %849 = vmatprep.mubr.f32.mxu0 0.0
    %850 = vmatmul.mubr.f32.gmra.mrb[0].mxu0 %v666
    %v851 = vpop.f32.mrb[0].mxu0
    %v852 = vadd.f32 %v627, %v851
    %v853 = vpop.f32.mrb[0].mxu0
    %854 = vmatprep.mubr.f32.mxu0 0.0
    %855 = vmatmul.mubr.f32.gmra.mrb[0].mxu0 %v669
    %v856 = vpop.f32.mrb[0].mxu0
    %v857 = vadd.f32 %v627, %v856
    %v858 = vpop.f32.mrb[0].mxu0
    %859 = vmatprep.mubr.f32.mxu0 0.0
    %860 = vmatmul.mubr.f32.gmra.mrb[0].mxu0 %v672
    %v861 = vpop.f32.mrb[0].mxu0
    %v862 = vadd.f32 %v627, %v861
    %v863 = vpop.f32.mrb[0].mxu0
    %864 = vmatprep.mubr.f32.mxu0 0.0
    %865 = vmatmul.mubr.f32.gmra.mrb[0].mxu0 %v675
    %v866 = vpop.f32.mrb[0].mxu0
    %v867 = vadd.f32 %v627, %v866
    %v868 = vpop.f32.mrb[0].mxu0
    %869 = vmatprep.mubr.f32.mxu0 0.0
    %870 = vmatmul.mubr.f32.gmra.mrb[0].mxu0 %v678
    %v871 = vpop.f32.mrb[0].mxu0
    %v872 = vadd.f32 %v627, %v871
    %v873 = vpop.f32.mrb[0].mxu0
    %874 = vmatprep.mubr.f32.mxu0 0.0
    %875 = vmatmul.mubr.f32.gmra.mrb[0].mxu0 %v681
    %v876 = vpop.f32.mrb[0].mxu0
    %v877 = vadd.f32 %v627, %v876
    %v878 = vpop.f32.mrb[0].mxu0
    %879 = vmatprep.mubr.f32.mxu0 0.0
    %880 = vmatmul.mubr.f32.gmra.mrb[0].mxu0 %v684
    %v881 = vpop.f32.mrb[0].mxu0
    %v882 = vadd.f32 %v627, %v881
    %v883 = vpop.f32.mrb[0].mxu0
    %884 = vmatprep.mubr.f32.mxu0 0.0
    %885 = vmatmul.mubr.f32.gmra.mrb[0].mxu0 %v687
    %v886 = vpop.f32.mrb[0].mxu0
    %v887 = vadd.f32 %v627, %v886
    %v888 = vpop.f32.mrb[0].mxu0
    %889 = vmatprep.mubr.f32.mxu0 0.0
    %890 = vmatmul.mubr.f32.gmra.mrb[0].mxu0 %v690
    %v891 = vpop.f32.mrb[0].mxu0
    %v892 = vadd.f32 %v627, %v891
    %v893 = vpop.f32.mrb[0].mxu0
    %894 = vmatprep.mubr.f32.mxu0 0.0
    %895 = vmatmul.mubr.f32.gmra.mrb[0].mxu0 %v693
    %v896 = vpop.f32.mrb[0].mxu0
    %v897 = vadd.f32 %v627, %v896
    %v898 = vpop.f32.mrb[0].mxu0
    %899 = vmatprep.mubr.f32.mxu0 0.0
    %900 = vmatmul.mubr.f32.gmra.mrb[0].mxu0 %v696
    %v901 = vpop.f32.mrb[0].mxu0
    %v902 = vadd.f32 %v627, %v901
    %v903 = vpop.f32.mrb[0].mxu0
    %904 = vmatprep.mubr.f32.mxu0 0.0
    %905 = vmatmul.mubr.f32.gmra.mrb[0].mxu0 %v699
    %v906 = vpop.f32.mrb[0].mxu0
    %v907 = vadd.f32 %v627, %v906
    %v908 = vpop.f32.mrb[0].mxu0
    %909 = vmatprep.mubr.f32.mxu0 0.0
    %910 = vmatmul.mubr.f32.gmra.mrb[0].mxu0 %v702
    %v911 = vpop.f32.mrb[0].mxu0
    %v912 = vadd.f32 %v627, %v911
    %v913 = vpop.f32.mrb[0].mxu0
    %914 = vmatprep.mubr.f32.mxu0 0.0
    %915 = vmatmul.mubr.f32.gmra.mrb[0].mxu0 %v705
    %v916 = vpop.f32.mrb[0].mxu0
    %v917 = vadd.f32 %v627, %v916
    %v918 = vpop.f32.mrb[0].mxu0
    %919 = vmatprep.mubr.f32.mxu0 0.0
    %920 = vmatmul.mubr.f32.gmra.mrb[0].mxu0 %v708
    %v921 = vpop.f32.mrb[0].mxu0
    %v922 = vadd.f32 %v627, %v921
    %v923 = vpop.f32.mrb[0].mxu0
    %924 = vmatprep.mubr.f32.mxu0 0.0
    %925 = vmatmul.mubr.f32.gmra.mrb[0].mxu0 %v711
    %v926 = vpop.f32.mrb[0].mxu0
    %v927 = vadd.f32 %v627, %v926
    %v928 = vpop.f32.mrb[0].mxu0
    %929 = vmatprep.mubr.f32.mxu0 0.0
    %930 = vmatmul.mubr.f32.gmra.mrb[0].mxu0 %v714
    %v931 = vpop.f32.mrb[0].mxu0
    %v932 = vadd.f32 %v627, %v931
    %v933 = vpop.f32.mrb[0].mxu0
    %934 = vmatprep.mubr.f32.mxu0 0.0
    %935 = vmatmul.mubr.f32.gmra.mrb[0].mxu0 %v717
    %v936 = vpop.f32.mrb[0].mxu0
    %v937 = vadd.f32 %v627, %v936
    %v938 = vpop.f32.mrb[0].mxu0
    %939 = vmatprep.mubr.f32.mxu0 0.0
    %940 = vmatmul.mubr.f32.gmra.mrb[0].mxu0 %v720
    %v941 = vpop.f32.mrb[0].mxu0
    %v942 = vadd.f32 %v627, %v941
    %v943 = vpop.f32.mrb[0].mxu0
    %944 = vmatprep.mubr.f32.mxu0 0.0
    %945 = vmatmul.mubr.f32.gmra.mrb[0].mxu0 %v723
    %v946 = vpop.f32.mrb[0].mxu0
    %v947 = vadd.f32 %v627, %v946
    %v948 = vpop.f32.mrb[0].mxu0
    %949 = vdwg.mxu0
    %s950 = scalar_lea.vmem %s3, 40
    %v951 = vld [vmem:[%s950] sm:$0xff]
    %v952 = vld [vmem:[%s950 + $0x8] sm:$0xff]
    %v953 = vld [vmem:[%s950 + $0x10] sm:$0xff]
    %v954 = vld [vmem:[%s950 + $0x18] sm:$0xff]
    %v955 = vld [vmem:[%s950 + $0x20] sm:$0x1]
    %956 = vmatprep.subr.mxu0 0.0
    %957 = vmatpush1.msra.mxu0 %v792
    %958 = vmatprep.subr.mxu0 0.0
    %959 = vmatpush1.msra.mxu0 %v797
    %960 = vmatprep.subr.mxu0 0.0
    %961 = vmatpush1.msra.mxu0 %v802
    %962 = vmatprep.subr.mxu0 0.0
    %963 = vmatpush1.msra.mxu0 %v807
    %964 = vmatprep.subr.mxu0 0.0
    %965 = vmatpush1.msra.mxu0 %v812
    %966 = vmatprep.subr.mxu0 0.0
    %967 = vmatpush1.msra.mxu0 %v817
    %968 = vmatprep.subr.mxu0 0.0
    %969 = vmatpush1.msra.mxu0 %v822
    %970 = vmatprep.subr.mxu0 0.0
    %971 = vmatpush1.msra.mxu0 %v827
    %972 = vmatprep.subr.mxu0 0.0
    %973 = vmatpush1.msra.mxu0 %v832
    %974 = vmatprep.subr.mxu0 0.0
    %975 = vmatpush1.msra.mxu0 %v837
    %976 = vmatprep.subr.mxu0 0.0
    %977 = vmatpush1.msra.mxu0 %v842
    %978 = vmatprep.subr.mxu0 0.0
    %979 = vmatpush1.msra.mxu0 %v847
    %980 = vmatprep.subr.mxu0 0.0
    %981 = vmatpush1.msra.mxu0 %v852
    %982 = vmatprep.subr.mxu0 0.0
    %983 = vmatpush1.msra.mxu0 %v857
    %984 = vmatprep.subr.mxu0 0.0
    %985 = vmatpush1.msra.mxu0 %v862
    %986 = vmatprep.subr.mxu0 0.0
    %987 = vmatpush1.msra.mxu0 %v867
    %988 = vmatprep.subr.mxu0 0.0
    %989 = vmatpush1.msra.mxu0 0.0
    %990 = vmatprep.subr.mxu0 0.0
    %991 = vmatpush1.msra.mxu0 0.0
    %992 = vmatprep.subr.mxu0 0.0
    %993 = vmatpush1.msra.mxu0 0.0
    %994 = vmatprep.subr.mxu0 0.0
    %995 = vmatpush1.msra.mxu0 0.0
    %996 = vmatprep.subr.mxu0 0.0
    %997 = vmatpush1.msra.mxu0 0.0
    %998 = vmatprep.subr.mxu0 0.0
    %999 = vmatpush1.msra.mxu0 0.0
    %1000 = vmatprep.subr.mxu0 0.0
    %1001 = vmatpush1.msra.mxu0 0.0
    %1002 = vmatprep.subr.mxu0 0.0
    %1003 = vmatpush1.msra.mxu0 0.0
    %1004 = vmatprep.subr.mxu0 0.0
    %1005 = vmatpush1.msra.mxu0 0.0
    %1006 = vmatprep.subr.mxu0 0.0
    %1007 = vmatpush1.msra.mxu0 0.0
    %1008 = vmatprep.subr.mxu0 0.0
    %1009 = vmatpush1.msra.mxu0 0.0
    %1010 = vmatprep.subr.mxu0 0.0
    %1011 = vmatpush1.msra.mxu0 0.0
    %1012 = vmatprep.subr.mxu0 0.0
    %1013 = vmatpush1.msra.mxu0 0.0
    %1014 = vmatprep.subr.mxu0 0.0
    %1015 = vmatpush1.msra.mxu0 0.0
    %1016 = vmatprep.subr.mxu0 0.0
    %1017 = vmatpush1.msra.mxu0 0.0
    %1018 = vmatprep.subr.mxu0 0.0
    %1019 = vmatpush1.msra.mxu0 0.0
    %1020 = vmatprep.mubr.f32.mxu0 0.0
    %1021 = vmatmul.mubr.f32.gmra.mrb[0].mxu0 %v178
    %v1022 = vpop.f32.mrb[0].mxu0
    %v1023 = vadd.f32 0.0, %v1022
    %v1024 = vpop.f32.mrb[0].mxu0
    %1025 = vmatprep.mubr.f32.mxu0 0.0
    %1026 = vmatmul.mubr.f32.gmra.mrb[0].mxu0 %v179
    %v1027 = vpop.f32.mrb[0].mxu0
    %v1028 = vadd.f32 0.0, %v1027
    %v1029 = vpop.f32.mrb[0].mxu0
    %1030 = vmatprep.mubr.f32.mxu0 0.0
    %1031 = vmatmul.mubr.f32.gmra.mrb[0].mxu0 %v180
    %v1032 = vpop.f32.mrb[0].mxu0
    %v1033 = vadd.f32 0.0, %v1032
    %v1034 = vpop.f32.mrb[0].mxu0
    %1035 = vmatprep.mubr.f32.mxu0 0.0
    %1036 = vmatmul.mubr.f32.gmra.mrb[0].mxu0 %v181
    %v1037 = vpop.f32.mrb[0].mxu0
    %v1038 = vadd.f32 0.0, %v1037
    %v1039 = vpop.f32.mrb[0].mxu0
    %1040 = vmatprep.mubr.f32.mxu0 0.0
    %1041 = vmatmul.mubr.f32.gmra.mrb[0].mxu0 %v182
    %v1042 = vpop.f32.mrb[0].mxu0
    %v1043 = vadd.f32 0.0, %v1042
    %v1044 = vpop.f32.mrb[0].mxu0
    %1045 = vmatprep.mubr.f32.mxu0 0.0
    %1046 = vmatmul.mubr.f32.gmra.mrb[0].mxu0 %v183
    %v1047 = vpop.f32.mrb[0].mxu0
    %v1048 = vadd.f32 0.0, %v1047
    %v1049 = vpop.f32.mrb[0].mxu0
    %1050 = vmatprep.mubr.f32.mxu0 0.0
    %1051 = vmatmul.mubr.f32.gmra.mrb[0].mxu0 %v184
    %v1052 = vpop.f32.mrb[0].mxu0
    %v1053 = vadd.f32 0.0, %v1052
    %v1054 = vpop.f32.mrb[0].mxu0
    %1055 = vmatprep.mubr.f32.mxu0 0.0
    %1056 = vmatmul.mubr.f32.gmra.mrb[0].mxu0 %v185
    %v1057 = vpop.f32.mrb[0].mxu0
    %v1058 = vadd.f32 0.0, %v1057
    %v1059 = vpop.f32.mrb[0].mxu0
    %1060 = vmatprep.mubr.f32.mxu0 0.0
    %1061 = vmatmul.mubr.f32.gmra.mrb[0].mxu0 %v186
    %v1062 = vpop.f32.mrb[0].mxu0
    %v1063 = vadd.f32 0.0, %v1062
    %v1064 = vpop.f32.mrb[0].mxu0
    %1065 = vmatprep.mubr.f32.mxu0 0.0
    %1066 = vmatmul.mubr.f32.gmra.mrb[0].mxu0 %v187
    %v1067 = vpop.f32.mrb[0].mxu0
    %v1068 = vadd.f32 0.0, %v1067
    %v1069 = vpop.f32.mrb[0].mxu0
    %1070 = vmatprep.mubr.f32.mxu0 0.0
    %1071 = vmatmul.mubr.f32.gmra.mrb[0].mxu0 %v188
    %v1072 = vpop.f32.mrb[0].mxu0
    %v1073 = vadd.f32 0.0, %v1072
    %v1074 = vpop.f32.mrb[0].mxu0
    %1075 = vmatprep.mubr.f32.mxu0 0.0
    %1076 = vmatmul.mubr.f32.gmra.mrb[0].mxu0 %v189
    %v1077 = vpop.f32.mrb[0].mxu0
    %v1078 = vadd.f32 0.0, %v1077
    %v1079 = vpop.f32.mrb[0].mxu0
    %1080 = vmatprep.mubr.f32.mxu0 0.0
    %1081 = vmatmul.mubr.f32.gmra.mrb[0].mxu0 %v190
    %v1082 = vpop.f32.mrb[0].mxu0
    %v1083 = vadd.f32 0.0, %v1082
    %v1084 = vpop.f32.mrb[0].mxu0
    %1085 = vmatprep.mubr.f32.mxu0 0.0
    %1086 = vmatmul.mubr.f32.gmra.mrb[0].mxu0 %v191
    %v1087 = vpop.f32.mrb[0].mxu0
    %v1088 = vadd.f32 0.0, %v1087
    %v1089 = vpop.f32.mrb[0].mxu0
    %1090 = vmatprep.mubr.f32.mxu0 0.0
    %1091 = vmatmul.mubr.f32.gmra.mrb[0].mxu0 %v192
    %v1092 = vpop.f32.mrb[0].mxu0
    %v1093 = vadd.f32 0.0, %v1092
    %v1094 = vpop.f32.mrb[0].mxu0
    %1095 = vmatprep.mubr.f32.mxu0 0.0
    %1096 = vmatmul.mubr.f32.gmra.mrb[0].mxu0 %v193
    %v1097 = vpop.f32.mrb[0].mxu0
    %v1098 = vadd.f32 0.0, %v1097
    %v1099 = vpop.f32.mrb[0].mxu0
    %1100 = vdwg.mxu0
    %1101 = vmatprep.subr.mxu0 0.0
    %1102 = vmatpush1.msra.mxu0 %v872
    %1103 = vmatprep.subr.mxu0 0.0
    %1104 = vmatpush1.msra.mxu0 %v877
    %1105 = vmatprep.subr.mxu0 0.0
    %1106 = vmatpush1.msra.mxu0 %v882
    %1107 = vmatprep.subr.mxu0 0.0
    %1108 = vmatpush1.msra.mxu0 %v887
    %1109 = vmatprep.subr.mxu0 0.0
    %1110 = vmatpush1.msra.mxu0 %v892
    %1111 = vmatprep.subr.mxu0 0.0
    %1112 = vmatpush1.msra.mxu0 %v897
    %1113 = vmatprep.subr.mxu0 0.0
    %1114 = vmatpush1.msra.mxu0 %v902
    %1115 = vmatprep.subr.mxu0 0.0
    %1116 = vmatpush1.msra.mxu0 %v907
    %1117 = vmatprep.subr.mxu0 0.0
    %1118 = vmatpush1.msra.mxu0 %v912
    %1119 = vmatprep.subr.mxu0 0.0
    %1120 = vmatpush1.msra.mxu0 %v917
    %1121 = vmatprep.subr.mxu0 0.0
    %1122 = vmatpush1.msra.mxu0 %v922
    %1123 = vmatprep.subr.mxu0 0.0
    %1124 = vmatpush1.msra.mxu0 %v927
    %1125 = vmatprep.subr.mxu0 0.0
    %1126 = vmatpush1.msra.mxu0 %v932
    %1127 = vmatprep.subr.mxu0 0.0
    %1128 = vmatpush1.msra.mxu0 %v937
    %1129 = vmatprep.subr.mxu0 0.0
    %1130 = vmatpush1.msra.mxu0 %v942
    %1131 = vmatprep.subr.mxu0 0.0
    %1132 = vmatpush1.msra.mxu0 %v947
    %1133 = vmatprep.subr.mxu0 0.0
    %1134 = vmatpush1.msra.mxu0 0.0
    %1135 = vmatprep.subr.mxu0 0.0
    %1136 = vmatpush1.msra.mxu0 0.0
    %1137 = vmatprep.subr.mxu0 0.0
    %1138 = vmatpush1.msra.mxu0 0.0
    %1139 = vmatprep.subr.mxu0 0.0
    %1140 = vmatpush1.msra.mxu0 0.0
    %1141 = vmatprep.subr.mxu0 0.0
    %1142 = vmatpush1.msra.mxu0 0.0
    %1143 = vmatprep.subr.mxu0 0.0
    %1144 = vmatpush1.msra.mxu0 0.0
    %1145 = vmatprep.subr.mxu0 0.0
    %1146 = vmatpush1.msra.mxu0 0.0
    %1147 = vmatprep.subr.mxu0 0.0
    %1148 = vmatpush1.msra.mxu0 0.0
    %1149 = vmatprep.subr.mxu0 0.0
    %1150 = vmatpush1.msra.mxu0 0.0
    %1151 = vmatprep.subr.mxu0 0.0
    %1152 = vmatpush1.msra.mxu0 0.0
    %1153 = vmatprep.subr.mxu0 0.0
    %1154 = vmatpush1.msra.mxu0 0.0
    %1155 = vmatprep.subr.mxu0 0.0
    %1156 = vmatpush1.msra.mxu0 0.0
    %1157 = vmatprep.subr.mxu0 0.0
    %1158 = vmatpush1.msra.mxu0 0.0
    %1159 = vmatprep.subr.mxu0 0.0
    %1160 = vmatpush1.msra.mxu0 0.0
    %1161 = vmatprep.subr.mxu0 0.0
    %1162 = vmatpush1.msra.mxu0 0.0
    %1163 = vmatprep.subr.mxu0 0.0
    %1164 = vmatpush1.msra.mxu0 0.0
    %1165 = vmatprep.mubr.f32.mxu0 0.0
    %1166 = vmatmul.mubr.f32.gmra.mrb[0].mxu0 %v313
    %v1167 = vpop.f32.mrb[0].mxu0
    %v1168 = vadd.f32 0.0, %v1167
    %v1169 = vpop.f32.mrb[0].mxu0
    %1170 = vmatprep.mubr.f32.mxu0 0.0
    %1171 = vmatmul.mubr.f32.gmra.mrb[0].mxu0 %v314
    %v1172 = vpop.f32.mrb[0].mxu0
    %v1173 = vadd.f32 0.0, %v1172
    %v1174 = vpop.f32.mrb[0].mxu0
    %1175 = vmatprep.mubr.f32.mxu0 0.0
    %1176 = vmatmul.mubr.f32.gmra.mrb[0].mxu0 %v315
    %v1177 = vpop.f32.mrb[0].mxu0
    %v1178 = vadd.f32 0.0, %v1177
    %v1179 = vpop.f32.mrb[0].mxu0
    %1180 = vmatprep.mubr.f32.mxu0 0.0
    %1181 = vmatmul.mubr.f32.gmra.mrb[0].mxu0 %v316
    %v1182 = vpop.f32.mrb[0].mxu0
    %v1183 = vadd.f32 0.0, %v1182
    %v1184 = vpop.f32.mrb[0].mxu0
    %1185 = vmatprep.mubr.f32.mxu0 0.0
    %1186 = vmatmul.mubr.f32.gmra.mrb[0].mxu0 %v317
    %v1187 = vpop.f32.mrb[0].mxu0
    %v1188 = vadd.f32 0.0, %v1187
    %v1189 = vpop.f32.mrb[0].mxu0
    %1190 = vmatprep.mubr.f32.mxu0 0.0
    %1191 = vmatmul.mubr.f32.gmra.mrb[0].mxu0 %v318
    %v1192 = vpop.f32.mrb[0].mxu0
    %v1193 = vadd.f32 0.0, %v1192
    %v1194 = vpop.f32.mrb[0].mxu0
    %1195 = vmatprep.mubr.f32.mxu0 0.0
    %1196 = vmatmul.mubr.f32.gmra.mrb[0].mxu0 %v319
    %v1197 = vpop.f32.mrb[0].mxu0
    %v1198 = vadd.f32 0.0, %v1197
    %v1199 = vpop.f32.mrb[0].mxu0
    %1200 = vmatprep.mubr.f32.mxu0 0.0
    %1201 = vmatmul.mubr.f32.gmra.mrb[0].mxu0 %v320
    %v1202 = vpop.f32.mrb[0].mxu0
    %v1203 = vadd.f32 0.0, %v1202
    %v1204 = vpop.f32.mrb[0].mxu0
    %1205 = vmatprep.mubr.f32.mxu0 0.0
    %1206 = vmatmul.mubr.f32.gmra.mrb[0].mxu0 %v321
    %v1207 = vpop.f32.mrb[0].mxu0
    %v1208 = vadd.f32 0.0, %v1207
    %v1209 = vpop.f32.mrb[0].mxu0
    %1210 = vmatprep.mubr.f32.mxu0 0.0
    %1211 = vmatmul.mubr.f32.gmra.mrb[0].mxu0 %v322
    %v1212 = vpop.f32.mrb[0].mxu0
    %v1213 = vadd.f32 0.0, %v1212
    %v1214 = vpop.f32.mrb[0].mxu0
    %1215 = vmatprep.mubr.f32.mxu0 0.0
    %1216 = vmatmul.mubr.f32.gmra.mrb[0].mxu0 %v323
    %v1217 = vpop.f32.mrb[0].mxu0
    %v1218 = vadd.f32 0.0, %v1217
    %v1219 = vpop.f32.mrb[0].mxu0
    %1220 = vmatprep.mubr.f32.mxu0 0.0
    %1221 = vmatmul.mubr.f32.gmra.mrb[0].mxu0 %v324
    %v1222 = vpop.f32.mrb[0].mxu0
    %v1223 = vadd.f32 0.0, %v1222
    %v1224 = vpop.f32.mrb[0].mxu0
    %1225 = vmatprep.mubr.f32.mxu0 0.0
    %1226 = vmatmul.mubr.f32.gmra.mrb[0].mxu0 %v325
    %v1227 = vpop.f32.mrb[0].mxu0
    %v1228 = vadd.f32 0.0, %v1227
    %v1229 = vpop.f32.mrb[0].mxu0
    %1230 = vmatprep.mubr.f32.mxu0 0.0
    %1231 = vmatmul.mubr.f32.gmra.mrb[0].mxu0 %v326
    %v1232 = vpop.f32.mrb[0].mxu0
    %v1233 = vadd.f32 0.0, %v1232
    %v1234 = vpop.f32.mrb[0].mxu0
    %1235 = vmatprep.mubr.f32.mxu0 0.0
    %1236 = vmatmul.mubr.f32.gmra.mrb[0].mxu0 %v327
    %v1237 = vpop.f32.mrb[0].mxu0
    %v1238 = vadd.f32 0.0, %v1237
    %v1239 = vpop.f32.mrb[0].mxu0
    %1240 = vmatprep.mubr.f32.mxu0 0.0
    %1241 = vmatmul.mubr.f32.gmra.mrb[0].mxu0 %v328
    %v1242 = vpop.f32.mrb[0].mxu0
    %v1243 = vadd.f32 0.0, %v1242
    %v1244 = vpop.f32.mrb[0].mxu0
    %1245 = vdwg.mxu0
    %v1246 = vlaneseq
    %v1247 = vshrl.u32 %v1246, 7
    %v1248 = vsub.s32 0, %v1247
    %v1249 = vrot.slane %v955, %v1248
    %v1251 = vsel %vm628, %v1023, 0
    %v1254 = vsel %vm628, %v1028, 0
    %v1257 = vsel %vm628, %v1033, 0
    %v1260 = vsel %vm628, %v1038, 0
    %v1263 = vsel %vm628, %v1043, 0
    %v1266 = vsel %vm628, %v1048, 0
    %v1269 = vsel %vm628, %v1053, 0
    %v1272 = vsel %vm628, %v1058, 0
    %v1275 = vsel %vm628, %v1063, 0
    %v1278 = vsel %vm628, %v1068, 0
    %v1281 = vsel %vm628, %v1073, 0
    %v1284 = vsel %vm628, %v1078, 0
    %v1287 = vsel %vm628, %v1083, 0
    %v1290 = vsel %vm628, %v1088, 0
    %v1293 = vsel %vm628, %v1093, 0
    %v1296 = vsel %vm628, %v1098, 0
    %v1299 = vsel %vm628, %v1168, 0
    %v1302 = vsel %vm628, %v1173, 0
    %v1305 = vsel %vm628, %v1178, 0
    %v1308 = vsel %vm628, %v1183, 0
    %v1311 = vsel %vm628, %v1188, 0
    %v1314 = vsel %vm628, %v1193, 0
    %v1317 = vsel %vm628, %v1198, 0
    %v1320 = vsel %vm628, %v1203, 0
    %v1323 = vsel %vm628, %v1208, 0
    %v1326 = vsel %vm628, %v1213, 0
    %v1329 = vsel %vm628, %v1218, 0
    %v1332 = vsel %vm628, %v1223, 0
    %v1335 = vsel %vm628, %v1228, 0
    %v1338 = vsel %vm628, %v1233, 0
    %v1341 = vsel %vm628, %v1238, 0
    %v1344 = vsel %vm628, %v1243, 0
    %1346 = vmatprep.subr.mxu0 0.0
    %1347 = vmatpush1.msra.mxu0 %v951
    %1348 = vmatprep.subr.mxu0 0.0
    %1349 = vmatpush1.msra.mxu0 %v952
    %1350 = vmatprep.subr.mxu0 0.0
    %1351 = vmatpush1.msra.mxu0 %v953
    %1352 = vmatprep.subr.mxu0 0.0
    %1353 = vmatpush1.msra.mxu0 %v954
    %1354 = vmatprep.subr.mxu0 0.0
    %1355 = vmatpush1.msra.mxu0 0.0
    %1356 = vmatprep.subr.mxu0 0.0
    %1357 = vmatpush1.msra.mxu0 0.0
    %1358 = vmatprep.subr.mxu0 0.0
    %1359 = vmatpush1.msra.mxu0 0.0
    %1360 = vmatprep.subr.mxu0 0.0
    %1361 = vmatpush1.msra.mxu0 0.0
    %1362 = vmatprep.subr.mxu0 0.0
    %1363 = vmatpush1.msra.mxu0 0.0
    %1364 = vmatprep.subr.mxu0 0.0
    %1365 = vmatpush1.msra.mxu0 0.0
    %1366 = vmatprep.subr.mxu0 0.0
    %1367 = vmatpush1.msra.mxu0 0.0
    %1368 = vmatprep.subr.mxu0 0.0
    %1369 = vmatpush1.msra.mxu0 0.0
    %1370 = vmatprep.subr.mxu0 0.0
    %1371 = vmatpush1.msra.mxu0 0.0
    %1372 = vmatprep.subr.mxu0 0.0
    %1373 = vmatpush1.msra.mxu0 0.0
    %1374 = vmatprep.subr.mxu0 0.0
    %1375 = vmatpush1.msra.mxu0 0.0
    %1376 = vmatprep.subr.mxu0 0.0
    %1377 = vmatpush1.msra.mxu0 0.0
    %1378 = vmatprep.subr.mxu0 0.0
    %1379 = vmatpush1.msra.mxu0 0.0
    %1380 = vmatprep.subr.mxu0 0.0
    %1381 = vmatpush1.msra.mxu0 0.0
    %1382 = vmatprep.subr.mxu0 0.0
    %1383 = vmatpush1.msra.mxu0 0.0
    %1384 = vmatprep.subr.mxu0 0.0
    %1385 = vmatpush1.msra.mxu0 0.0
    %1386 = vmatprep.subr.mxu0 0.0
    %1387 = vmatpush1.msra.mxu0 0.0
    %1388 = vmatprep.subr.mxu0 0.0
    %1389 = vmatpush1.msra.mxu0 0.0
    %1390 = vmatprep.subr.mxu0 0.0
    %1391 = vmatpush1.msra.mxu0 0.0
    %1392 = vmatprep.subr.mxu0 0.0
    %1393 = vmatpush1.msra.mxu0 0.0
    %1394 = vmatprep.subr.mxu0 0.0
    %1395 = vmatpush1.msra.mxu0 0.0
    %1396 = vmatprep.subr.mxu0 0.0
    %1397 = vmatpush1.msra.mxu0 0.0
    %1398 = vmatprep.subr.mxu0 0.0
    %1399 = vmatpush1.msra.mxu0 0.0
    %1400 = vmatprep.subr.mxu0 0.0
    %1401 = vmatpush1.msra.mxu0 0.0
    %1402 = vmatprep.subr.mxu0 0.0
    %1403 = vmatpush1.msra.mxu0 0.0
    %1404 = vmatprep.subr.mxu0 0.0
    %1405 = vmatpush1.msra.mxu0 0.0
    %1406 = vmatprep.subr.mxu0 0.0
    %1407 = vmatpush1.msra.mxu0 0.0
    %1408 = vmatprep.subr.mxu0 0.0
    %1409 = vmatpush1.msra.mxu0 0.0
    %1410 = vmatprep.mubr.f32.mxu0 0.0
    %1411 = vmatmul.mubr.f32.gmra.mrb[0].mxu0 %v1251
    %v1412 = vpop.f32.mrb[0].mxu0
    %v1413 = vadd.f32 %v1249, %v1412
    %v1414 = vpop.f32.mrb[0].mxu0
    %1415 = vmatprep.mubr.f32.mxu0 0.0
    %1416 = vmatmul.mubr.f32.gmra.mrb[0].mxu0 %v1254
    %v1417 = vpop.f32.mrb[0].mxu0
    %v1418 = vadd.f32 %v1249, %v1417
    %v1419 = vpop.f32.mrb[0].mxu0
    %1420 = vmatprep.mubr.f32.mxu0 0.0
    %1421 = vmatmul.mubr.f32.gmra.mrb[0].mxu0 %v1257
    %v1422 = vpop.f32.mrb[0].mxu0
    %v1423 = vadd.f32 %v1249, %v1422
    %v1424 = vpop.f32.mrb[0].mxu0
    %1425 = vmatprep.mubr.f32.mxu0 0.0
    %1426 = vmatmul.mubr.f32.gmra.mrb[0].mxu0 %v1260
    %v1427 = vpop.f32.mrb[0].mxu0
    %v1428 = vadd.f32 %v1249, %v1427
    %v1429 = vpop.f32.mrb[0].mxu0
    %1430 = vmatprep.mubr.f32.mxu0 0.0
    %1431 = vmatmul.mubr.f32.gmra.mrb[0].mxu0 %v1263
    %v1432 = vpop.f32.mrb[0].mxu0
    %v1433 = vadd.f32 %v1249, %v1432
    %v1434 = vpop.f32.mrb[0].mxu0
    %1435 = vmatprep.mubr.f32.mxu0 0.0
    %1436 = vmatmul.mubr.f32.gmra.mrb[0].mxu0 %v1266
    %v1437 = vpop.f32.mrb[0].mxu0
    %v1438 = vadd.f32 %v1249, %v1437
    %v1439 = vpop.f32.mrb[0].mxu0
    %1440 = vmatprep.mubr.f32.mxu0 0.0
    %1441 = vmatmul.mubr.f32.gmra.mrb[0].mxu0 %v1269
    %v1442 = vpop.f32.mrb[0].mxu0
    %v1443 = vadd.f32 %v1249, %v1442
    %v1444 = vpop.f32.mrb[0].mxu0
    %1445 = vmatprep.mubr.f32.mxu0 0.0
    %1446 = vmatmul.mubr.f32.gmra.mrb[0].mxu0 %v1272
    %v1447 = vpop.f32.mrb[0].mxu0
    %v1448 = vadd.f32 %v1249, %v1447
    %v1449 = vpop.f32.mrb[0].mxu0
    %1450 = vmatprep.mubr.f32.mxu0 0.0
    %1451 = vmatmul.mubr.f32.gmra.mrb[0].mxu0 %v1275
    %v1452 = vpop.f32.mrb[0].mxu0
    %v1453 = vadd.f32 %v1249, %v1452
    %v1454 = vpop.f32.mrb[0].mxu0
    %1455 = vmatprep.mubr.f32.mxu0 0.0
    %1456 = vmatmul.mubr.f32.gmra.mrb[0].mxu0 %v1278
    %v1457 = vpop.f32.mrb[0].mxu0
    %v1458 = vadd.f32 %v1249, %v1457
    %v1459 = vpop.f32.mrb[0].mxu0
    %1460 = vmatprep.mubr.f32.mxu0 0.0
    %1461 = vmatmul.mubr.f32.gmra.mrb[0].mxu0 %v1281
    %v1462 = vpop.f32.mrb[0].mxu0
    %v1463 = vadd.f32 %v1249, %v1462
    %v1464 = vpop.f32.mrb[0].mxu0
    %1465 = vmatprep.mubr.f32.mxu0 0.0
    %1466 = vmatmul.mubr.f32.gmra.mrb[0].mxu0 %v1284
    %v1467 = vpop.f32.mrb[0].mxu0
    %v1468 = vadd.f32 %v1249, %v1467
    %v1469 = vpop.f32.mrb[0].mxu0
    %1470 = vmatprep.mubr.f32.mxu0 0.0
    %1471 = vmatmul.mubr.f32.gmra.mrb[0].mxu0 %v1287
    %v1472 = vpop.f32.mrb[0].mxu0
    %v1473 = vadd.f32 %v1249, %v1472
    %v1474 = vpop.f32.mrb[0].mxu0
    %1475 = vmatprep.mubr.f32.mxu0 0.0
    %1476 = vmatmul.mubr.f32.gmra.mrb[0].mxu0 %v1290
    %v1477 = vpop.f32.mrb[0].mxu0
    %v1478 = vadd.f32 %v1249, %v1477
    %v1479 = vpop.f32.mrb[0].mxu0
    %1480 = vmatprep.mubr.f32.mxu0 0.0
    %1481 = vmatmul.mubr.f32.gmra.mrb[0].mxu0 %v1293
    %v1482 = vpop.f32.mrb[0].mxu0
    %v1483 = vadd.f32 %v1249, %v1482
    %v1484 = vpop.f32.mrb[0].mxu0
    %1485 = vmatprep.mubr.f32.mxu0 0.0
    %1486 = vmatmul.mubr.f32.gmra.mrb[0].mxu0 %v1296
    %v1487 = vpop.f32.mrb[0].mxu0
    %v1488 = vadd.f32 %v1249, %v1487
    %v1489 = vpop.f32.mrb[0].mxu0
    %1490 = vmatprep.mubr.f32.mxu0 0.0
    %1491 = vmatmul.mubr.f32.gmra.mrb[0].mxu0 %v1299
    %v1492 = vpop.f32.mrb[0].mxu0
    %v1493 = vadd.f32 %v1249, %v1492
    %v1494 = vpop.f32.mrb[0].mxu0
    %1495 = vmatprep.mubr.f32.mxu0 0.0
    %1496 = vmatmul.mubr.f32.gmra.mrb[0].mxu0 %v1302
    %v1497 = vpop.f32.mrb[0].mxu0
    %v1498 = vadd.f32 %v1249, %v1497
    %v1499 = vpop.f32.mrb[0].mxu0
    %1500 = vmatprep.mubr.f32.mxu0 0.0
    %1501 = vmatmul.mubr.f32.gmra.mrb[0].mxu0 %v1305
    %v1502 = vpop.f32.mrb[0].mxu0
    %v1503 = vadd.f32 %v1249, %v1502
    %v1504 = vpop.f32.mrb[0].mxu0
    %1505 = vmatprep.mubr.f32.mxu0 0.0
    %1506 = vmatmul.mubr.f32.gmra.mrb[0].mxu0 %v1308
    %v1507 = vpop.f32.mrb[0].mxu0
    %v1508 = vadd.f32 %v1249, %v1507
    %v1509 = vpop.f32.mrb[0].mxu0
    %1510 = vmatprep.mubr.f32.mxu0 0.0
    %1511 = vmatmul.mubr.f32.gmra.mrb[0].mxu0 %v1311
    %v1512 = vpop.f32.mrb[0].mxu0
    %v1513 = vadd.f32 %v1249, %v1512
    %v1514 = vpop.f32.mrb[0].mxu0
    %1515 = vmatprep.mubr.f32.mxu0 0.0
    %1516 = vmatmul.mubr.f32.gmra.mrb[0].mxu0 %v1314
    %v1517 = vpop.f32.mrb[0].mxu0
    %v1518 = vadd.f32 %v1249, %v1517
    %v1519 = vpop.f32.mrb[0].mxu0
    %1520 = vmatprep.mubr.f32.mxu0 0.0
    %1521 = vmatmul.mubr.f32.gmra.mrb[0].mxu0 %v1317
    %v1522 = vpop.f32.mrb[0].mxu0
    %v1523 = vadd.f32 %v1249, %v1522
    %v1524 = vpop.f32.mrb[0].mxu0
    %1525 = vmatprep.mubr.f32.mxu0 0.0
    %1526 = vmatmul.mubr.f32.gmra.mrb[0].mxu0 %v1320
    %v1527 = vpop.f32.mrb[0].mxu0
    %v1528 = vadd.f32 %v1249, %v1527
    %v1529 = vpop.f32.mrb[0].mxu0
    %1530 = vmatprep.mubr.f32.mxu0 0.0
    %1531 = vmatmul.mubr.f32.gmra.mrb[0].mxu0 %v1323
    %v1532 = vpop.f32.mrb[0].mxu0
    %v1533 = vadd.f32 %v1249, %v1532
    %v1534 = vpop.f32.mrb[0].mxu0
    %1535 = vmatprep.mubr.f32.mxu0 0.0
    %1536 = vmatmul.mubr.f32.gmra.mrb[0].mxu0 %v1326
    %v1537 = vpop.f32.mrb[0].mxu0
    %v1538 = vadd.f32 %v1249, %v1537
    %v1539 = vpop.f32.mrb[0].mxu0
    %1540 = vmatprep.mubr.f32.mxu0 0.0
    %1541 = vmatmul.mubr.f32.gmra.mrb[0].mxu0 %v1329
    %v1542 = vpop.f32.mrb[0].mxu0
    %v1543 = vadd.f32 %v1249, %v1542
    %v1544 = vpop.f32.mrb[0].mxu0
    %1545 = vmatprep.mubr.f32.mxu0 0.0
    %1546 = vmatmul.mubr.f32.gmra.mrb[0].mxu0 %v1332
    %v1547 = vpop.f32.mrb[0].mxu0
    %v1548 = vadd.f32 %v1249, %v1547
    %v1549 = vpop.f32.mrb[0].mxu0
    %1550 = vmatprep.mubr.f32.mxu0 0.0
    %1551 = vmatmul.mubr.f32.gmra.mrb[0].mxu0 %v1335
    %v1552 = vpop.f32.mrb[0].mxu0
    %v1553 = vadd.f32 %v1249, %v1552
    %v1554 = vpop.f32.mrb[0].mxu0
    %1555 = vmatprep.mubr.f32.mxu0 0.0
    %1556 = vmatmul.mubr.f32.gmra.mrb[0].mxu0 %v1338
    %v1557 = vpop.f32.mrb[0].mxu0
    %v1558 = vadd.f32 %v1249, %v1557
    %v1559 = vpop.f32.mrb[0].mxu0
    %1560 = vmatprep.mubr.f32.mxu0 0.0
    %1561 = vmatmul.mubr.f32.gmra.mrb[0].mxu0 %v1341
    %v1562 = vpop.f32.mrb[0].mxu0
    %v1563 = vadd.f32 %v1249, %v1562
    %v1564 = vpop.f32.mrb[0].mxu0
    %1565 = vmatprep.mubr.f32.mxu0 0.0
    %1566 = vmatmul.mubr.f32.gmra.mrb[0].mxu0 %v1344
    %v1567 = vpop.f32.mrb[0].mxu0
    %v1568 = vadd.f32 %v1249, %v1567
    %v1569 = vpop.f32.mrb[0].mxu0
    %1570 = vdwg.mxu0
    %s1571 = scalar_lea.vmem %s3, 80
    %v1572 = vld [vmem:[%s1571] sm:$0xff]
    %v1573 = vld [vmem:[%s1571 + $0x8] sm:$0xff]
    %v1574 = vld [vmem:[%s1571 + $0x10] sm:$0xff]
    %v1575 = vld [vmem:[%s1571 + $0x18] sm:$0xff]
    %v1576 = vld [vmem:[%s1571 + $0x20] sm:$0x1]
    %1577 = vmatprep.subr.mxu0 0.0
    %1578 = vmatpush1.msra.mxu0 %v1413
    %1579 = vmatprep.subr.mxu0 0.0
    %1580 = vmatpush1.msra.mxu0 %v1418
    %1581 = vmatprep.subr.mxu0 0.0
    %1582 = vmatpush1.msra.mxu0 %v1423
    %1583 = vmatprep.subr.mxu0 0.0
    %1584 = vmatpush1.msra.mxu0 %v1428
    %1585 = vmatprep.subr.mxu0 0.0
    %1586 = vmatpush1.msra.mxu0 %v1433
    %1587 = vmatprep.subr.mxu0 0.0
    %1588 = vmatpush1.msra.mxu0 %v1438
    %1589 = vmatprep.subr.mxu0 0.0
    %1590 = vmatpush1.msra.mxu0 %v1443
    %1591 = vmatprep.subr.mxu0 0.0
    %1592 = vmatpush1.msra.mxu0 %v1448
    %1593 = vmatprep.subr.mxu0 0.0
    %1594 = vmatpush1.msra.mxu0 %v1453
    %1595 = vmatprep.subr.mxu0 0.0
    %1596 = vmatpush1.msra.mxu0 %v1458
    %1597 = vmatprep.subr.mxu0 0.0
    %1598 = vmatpush1.msra.mxu0 %v1463
    %1599 = vmatprep.subr.mxu0 0.0
    %1600 = vmatpush1.msra.mxu0 %v1468
    %1601 = vmatprep.subr.mxu0 0.0
    %1602 = vmatpush1.msra.mxu0 %v1473
    %1603 = vmatprep.subr.mxu0 0.0
    %1604 = vmatpush1.msra.mxu0 %v1478
    %1605 = vmatprep.subr.mxu0 0.0
    %1606 = vmatpush1.msra.mxu0 %v1483
    %1607 = vmatprep.subr.mxu0 0.0
    %1608 = vmatpush1.msra.mxu0 %v1488
    %1609 = vmatprep.subr.mxu0 0.0
    %1610 = vmatpush1.msra.mxu0 0.0
    %1611 = vmatprep.subr.mxu0 0.0
    %1612 = vmatpush1.msra.mxu0 0.0
    %1613 = vmatprep.subr.mxu0 0.0
    %1614 = vmatpush1.msra.mxu0 0.0
    %1615 = vmatprep.subr.mxu0 0.0
    %1616 = vmatpush1.msra.mxu0 0.0
    %1617 = vmatprep.subr.mxu0 0.0
    %1618 = vmatpush1.msra.mxu0 0.0
    %1619 = vmatprep.subr.mxu0 0.0
    %1620 = vmatpush1.msra.mxu0 0.0
    %1621 = vmatprep.subr.mxu0 0.0
    %1622 = vmatpush1.msra.mxu0 0.0
    %1623 = vmatprep.subr.mxu0 0.0
    %1624 = vmatpush1.msra.mxu0 0.0
    %1625 = vmatprep.subr.mxu0 0.0
    %1626 = vmatpush1.msra.mxu0 0.0
    %1627 = vmatprep.subr.mxu0 0.0
    %1628 = vmatpush1.msra.mxu0 0.0
    %1629 = vmatprep.subr.mxu0 0.0
    %1630 = vmatpush1.msra.mxu0 0.0
    %1631 = vmatprep.subr.mxu0 0.0
    %1632 = vmatpush1.msra.mxu0 0.0
    %1633 = vmatprep.subr.mxu0 0.0
    %1634 = vmatpush1.msra.mxu0 0.0
    %1635 = vmatprep.subr.mxu0 0.0
    %1636 = vmatpush1.msra.mxu0 0.0
    %1637 = vmatprep.subr.mxu0 0.0
    %1638 = vmatpush1.msra.mxu0 0.0
    %1639 = vmatprep.subr.mxu0 0.0
    %1640 = vmatpush1.msra.mxu0 0.0
    %1641 = vmatprep.mubr.f32.mxu0 0.0
    %1642 = vmatmul.mubr.f32.gmra.mrb[0].mxu0 %v178
    %v1643 = vpop.f32.mrb[0].mxu0
    %v1644 = vadd.f32 0.0, %v1643
    %v1645 = vpop.f32.mrb[0].mxu0
    %1646 = vmatprep.mubr.f32.mxu0 0.0
    %1647 = vmatmul.mubr.f32.gmra.mrb[0].mxu0 %v179
    %v1648 = vpop.f32.mrb[0].mxu0
    %v1649 = vadd.f32 0.0, %v1648
    %v1650 = vpop.f32.mrb[0].mxu0
    %1651 = vmatprep.mubr.f32.mxu0 0.0
    %1652 = vmatmul.mubr.f32.gmra.mrb[0].mxu0 %v180
    %v1653 = vpop.f32.mrb[0].mxu0
    %v1654 = vadd.f32 0.0, %v1653
    %v1655 = vpop.f32.mrb[0].mxu0
    %1656 = vmatprep.mubr.f32.mxu0 0.0
    %1657 = vmatmul.mubr.f32.gmra.mrb[0].mxu0 %v181
    %v1658 = vpop.f32.mrb[0].mxu0
    %v1659 = vadd.f32 0.0, %v1658
    %v1660 = vpop.f32.mrb[0].mxu0
    %1661 = vmatprep.mubr.f32.mxu0 0.0
    %1662 = vmatmul.mubr.f32.gmra.mrb[0].mxu0 %v182
    %v1663 = vpop.f32.mrb[0].mxu0
    %v1664 = vadd.f32 0.0, %v1663
    %v1665 = vpop.f32.mrb[0].mxu0
    %1666 = vmatprep.mubr.f32.mxu0 0.0
    %1667 = vmatmul.mubr.f32.gmra.mrb[0].mxu0 %v183
    %v1668 = vpop.f32.mrb[0].mxu0
    %v1669 = vadd.f32 0.0, %v1668
    %v1670 = vpop.f32.mrb[0].mxu0
    %1671 = vmatprep.mubr.f32.mxu0 0.0
    %1672 = vmatmul.mubr.f32.gmra.mrb[0].mxu0 %v184
    %v1673 = vpop.f32.mrb[0].mxu0
    %v1674 = vadd.f32 0.0, %v1673
    %v1675 = vpop.f32.mrb[0].mxu0
    %1676 = vmatprep.mubr.f32.mxu0 0.0
    %1677 = vmatmul.mubr.f32.gmra.mrb[0].mxu0 %v185
    %v1678 = vpop.f32.mrb[0].mxu0
    %v1679 = vadd.f32 0.0, %v1678
    %v1680 = vpop.f32.mrb[0].mxu0
    %1681 = vmatprep.mubr.f32.mxu0 0.0
    %1682 = vmatmul.mubr.f32.gmra.mrb[0].mxu0 %v186
    %v1683 = vpop.f32.mrb[0].mxu0
    %v1684 = vadd.f32 0.0, %v1683
    %v1685 = vpop.f32.mrb[0].mxu0
    %1686 = vmatprep.mubr.f32.mxu0 0.0
    %1687 = vmatmul.mubr.f32.gmra.mrb[0].mxu0 %v187
    %v1688 = vpop.f32.mrb[0].mxu0
    %v1689 = vadd.f32 0.0, %v1688
    %v1690 = vpop.f32.mrb[0].mxu0
    %1691 = vmatprep.mubr.f32.mxu0 0.0
    %1692 = vmatmul.mubr.f32.gmra.mrb[0].mxu0 %v188
    %v1693 = vpop.f32.mrb[0].mxu0
    %v1694 = vadd.f32 0.0, %v1693
    %v1695 = vpop.f32.mrb[0].mxu0
    %1696 = vmatprep.mubr.f32.mxu0 0.0
    %1697 = vmatmul.mubr.f32.gmra.mrb[0].mxu0 %v189
    %v1698 = vpop.f32.mrb[0].mxu0
    %v1699 = vadd.f32 0.0, %v1698
    %v1700 = vpop.f32.mrb[0].mxu0
    %1701 = vmatprep.mubr.f32.mxu0 0.0
    %1702 = vmatmul.mubr.f32.gmra.mrb[0].mxu0 %v190
    %v1703 = vpop.f32.mrb[0].mxu0
    %v1704 = vadd.f32 0.0, %v1703
    %v1705 = vpop.f32.mrb[0].mxu0
    %1706 = vmatprep.mubr.f32.mxu0 0.0
    %1707 = vmatmul.mubr.f32.gmra.mrb[0].mxu0 %v191
    %v1708 = vpop.f32.mrb[0].mxu0
    %v1709 = vadd.f32 0.0, %v1708
    %v1710 = vpop.f32.mrb[0].mxu0
    %1711 = vmatprep.mubr.f32.mxu0 0.0
    %1712 = vmatmul.mubr.f32.gmra.mrb[0].mxu0 %v192
    %v1713 = vpop.f32.mrb[0].mxu0
    %v1714 = vadd.f32 0.0, %v1713
    %v1715 = vpop.f32.mrb[0].mxu0
    %1716 = vmatprep.mubr.f32.mxu0 0.0
    %1717 = vmatmul.mubr.f32.gmra.mrb[0].mxu0 %v193
    %v1718 = vpop.f32.mrb[0].mxu0
    %v1719 = vadd.f32 0.0, %v1718
    %v1720 = vpop.f32.mrb[0].mxu0
    %1721 = vdwg.mxu0
    %1722 = vmatprep.subr.mxu0 0.0
    %1723 = vmatpush1.msra.mxu0 %v1493
    %1724 = vmatprep.subr.mxu0 0.0
    %1725 = vmatpush1.msra.mxu0 %v1498
    %1726 = vmatprep.subr.mxu0 0.0
    %1727 = vmatpush1.msra.mxu0 %v1503
    %1728 = vmatprep.subr.mxu0 0.0
    %1729 = vmatpush1.msra.mxu0 %v1508
    %1730 = vmatprep.subr.mxu0 0.0
    %1731 = vmatpush1.msra.mxu0 %v1513
    %1732 = vmatprep.subr.mxu0 0.0
    %1733 = vmatpush1.msra.mxu0 %v1518
    %1734 = vmatprep.subr.mxu0 0.0
    %1735 = vmatpush1.msra.mxu0 %v1523
    %1736 = vmatprep.subr.mxu0 0.0
    %1737 = vmatpush1.msra.mxu0 %v1528
    %1738 = vmatprep.subr.mxu0 0.0
    %1739 = vmatpush1.msra.mxu0 %v1533
    %1740 = vmatprep.subr.mxu0 0.0
    %1741 = vmatpush1.msra.mxu0 %v1538
    %1742 = vmatprep.subr.mxu0 0.0
    %1743 = vmatpush1.msra.mxu0 %v1543
    %1744 = vmatprep.subr.mxu0 0.0
    %1745 = vmatpush1.msra.mxu0 %v1548
    %1746 = vmatprep.subr.mxu0 0.0
    %1747 = vmatpush1.msra.mxu0 %v1553
    %1748 = vmatprep.subr.mxu0 0.0
    %1749 = vmatpush1.msra.mxu0 %v1558
    %1750 = vmatprep.subr.mxu0 0.0
    %1751 = vmatpush1.msra.mxu0 %v1563
    %1752 = vmatprep.subr.mxu0 0.0
    %1753 = vmatpush1.msra.mxu0 %v1568
    %1754 = vmatprep.subr.mxu0 0.0
    %1755 = vmatpush1.msra.mxu0 0.0
    %1756 = vmatprep.subr.mxu0 0.0
    %1757 = vmatpush1.msra.mxu0 0.0
    %1758 = vmatprep.subr.mxu0 0.0
    %1759 = vmatpush1.msra.mxu0 0.0
    %1760 = vmatprep.subr.mxu0 0.0
    %1761 = vmatpush1.msra.mxu0 0.0
    %1762 = vmatprep.subr.mxu0 0.0
    %1763 = vmatpush1.msra.mxu0 0.0
    %1764 = vmatprep.subr.mxu0 0.0
    %1765 = vmatpush1.msra.mxu0 0.0
    %1766 = vmatprep.subr.mxu0 0.0
    %1767 = vmatpush1.msra.mxu0 0.0
    %1768 = vmatprep.subr.mxu0 0.0
    %1769 = vmatpush1.msra.mxu0 0.0
    %1770 = vmatprep.subr.mxu0 0.0
    %1771 = vmatpush1.msra.mxu0 0.0
    %1772 = vmatprep.subr.mxu0 0.0
    %1773 = vmatpush1.msra.mxu0 0.0
    %1774 = vmatprep.subr.mxu0 0.0
    %1775 = vmatpush1.msra.mxu0 0.0
    %1776 = vmatprep.subr.mxu0 0.0
    %1777 = vmatpush1.msra.mxu0 0.0
    %1778 = vmatprep.subr.mxu0 0.0
    %1779 = vmatpush1.msra.mxu0 0.0
    %1780 = vmatprep.subr.mxu0 0.0
    %1781 = vmatpush1.msra.mxu0 0.0
    %1782 = vmatprep.subr.mxu0 0.0
    %1783 = vmatpush1.msra.mxu0 0.0
    %1784 = vmatprep.subr.mxu0 0.0
    %1785 = vmatpush1.msra.mxu0 0.0
    %1786 = vmatprep.mubr.f32.mxu0 0.0
    %1787 = vmatmul.mubr.f32.gmra.mrb[0].mxu0 %v313
    %v1788 = vpop.f32.mrb[0].mxu0
    %v1789 = vadd.f32 0.0, %v1788
    %v1790 = vpop.f32.mrb[0].mxu0
    %1791 = vmatprep.mubr.f32.mxu0 0.0
    %1792 = vmatmul.mubr.f32.gmra.mrb[0].mxu0 %v314
    %v1793 = vpop.f32.mrb[0].mxu0
    %v1794 = vadd.f32 0.0, %v1793
    %v1795 = vpop.f32.mrb[0].mxu0
    %1796 = vmatprep.mubr.f32.mxu0 0.0
    %1797 = vmatmul.mubr.f32.gmra.mrb[0].mxu0 %v315
    %v1798 = vpop.f32.mrb[0].mxu0
    %v1799 = vadd.f32 0.0, %v1798
    %v1800 = vpop.f32.mrb[0].mxu0
    %1801 = vmatprep.mubr.f32.mxu0 0.0
    %1802 = vmatmul.mubr.f32.gmra.mrb[0].mxu0 %v316
    %v1803 = vpop.f32.mrb[0].mxu0
    %v1804 = vadd.f32 0.0, %v1803
    %v1805 = vpop.f32.mrb[0].mxu0
    %1806 = vmatprep.mubr.f32.mxu0 0.0
    %1807 = vmatmul.mubr.f32.gmra.mrb[0].mxu0 %v317
    %v1808 = vpop.f32.mrb[0].mxu0
    %v1809 = vadd.f32 0.0, %v1808
    %v1810 = vpop.f32.mrb[0].mxu0
    %1811 = vmatprep.mubr.f32.mxu0 0.0
    %1812 = vmatmul.mubr.f32.gmra.mrb[0].mxu0 %v318
    %v1813 = vpop.f32.mrb[0].mxu0
    %v1814 = vadd.f32 0.0, %v1813
    %v1815 = vpop.f32.mrb[0].mxu0
    %1816 = vmatprep.mubr.f32.mxu0 0.0
    %1817 = vmatmul.mubr.f32.gmra.mrb[0].mxu0 %v319
    %v1818 = vpop.f32.mrb[0].mxu0
    %v1819 = vadd.f32 0.0, %v1818
    %v1820 = vpop.f32.mrb[0].mxu0
    %1821 = vmatprep.mubr.f32.mxu0 0.0
    %1822 = vmatmul.mubr.f32.gmra.mrb[0].mxu0 %v320
    %v1823 = vpop.f32.mrb[0].mxu0
    %v1824 = vadd.f32 0.0, %v1823
    %v1825 = vpop.f32.mrb[0].mxu0
    %1826 = vmatprep.mubr.f32.mxu0 0.0
    %1827 = vmatmul.mubr.f32.gmra.mrb[0].mxu0 %v321
    %v1828 = vpop.f32.mrb[0].mxu0
    %v1829 = vadd.f32 0.0, %v1828
    %v1830 = vpop.f32.mrb[0].mxu0
    %1831 = vmatprep.mubr.f32.mxu0 0.0
    %1832 = vmatmul.mubr.f32.gmra.mrb[0].mxu0 %v322
    %v1833 = vpop.f32.mrb[0].mxu0
    %v1834 = vadd.f32 0.0, %v1833
    %v1835 = vpop.f32.mrb[0].mxu0
    %1836 = vmatprep.mubr.f32.mxu0 0.0
    %1837 = vmatmul.mubr.f32.gmra.mrb[0].mxu0 %v323
    %v1838 = vpop.f32.mrb[0].mxu0
    %v1839 = vadd.f32 0.0, %v1838
    %v1840 = vpop.f32.mrb[0].mxu0
    %1841 = vmatprep.mubr.f32.mxu0 0.0
    %1842 = vmatmul.mubr.f32.gmra.mrb[0].mxu0 %v324
    %v1843 = vpop.f32.mrb[0].mxu0
    %v1844 = vadd.f32 0.0, %v1843
    %v1845 = vpop.f32.mrb[0].mxu0
    %1846 = vmatprep.mubr.f32.mxu0 0.0
    %1847 = vmatmul.mubr.f32.gmra.mrb[0].mxu0 %v325
    %v1848 = vpop.f32.mrb[0].mxu0
    %v1849 = vadd.f32 0.0, %v1848
    %v1850 = vpop.f32.mrb[0].mxu0
    %1851 = vmatprep.mubr.f32.mxu0 0.0
    %1852 = vmatmul.mubr.f32.gmra.mrb[0].mxu0 %v326
    %v1853 = vpop.f32.mrb[0].mxu0
    %v1854 = vadd.f32 0.0, %v1853
    %v1855 = vpop.f32.mrb[0].mxu0
    %1856 = vmatprep.mubr.f32.mxu0 0.0
    %1857 = vmatmul.mubr.f32.gmra.mrb[0].mxu0 %v327
    %v1858 = vpop.f32.mrb[0].mxu0
    %v1859 = vadd.f32 0.0, %v1858
    %v1860 = vpop.f32.mrb[0].mxu0
    %1861 = vmatprep.mubr.f32.mxu0 0.0
    %1862 = vmatmul.mubr.f32.gmra.mrb[0].mxu0 %v328
    %v1863 = vpop.f32.mrb[0].mxu0
    %v1864 = vadd.f32 0.0, %v1863
    %v1865 = vpop.f32.mrb[0].mxu0
    %1866 = vdwg.mxu0
    %v1867 = vlaneseq
    %v1868 = vshrl.u32 %v1867, 7
    %v1869 = vsub.s32 0, %v1868
    %v1870 = vrot.slane %v1576, %v1869
    %v1872 = vsel %vm628, %v1644, 0
    %v1875 = vsel %vm628, %v1649, 0
    %v1878 = vsel %vm628, %v1654, 0
    %v1881 = vsel %vm628, %v1659, 0
    %v1884 = vsel %vm628, %v1664, 0
    %v1887 = vsel %vm628, %v1669, 0
    %v1890 = vsel %vm628, %v1674, 0
    %v1893 = vsel %vm628, %v1679, 0
    %v1896 = vsel %vm628, %v1684, 0
    %v1899 = vsel %vm628, %v1689, 0
    %v1902 = vsel %vm628, %v1694, 0
    %v1905 = vsel %vm628, %v1699, 0
    %v1908 = vsel %vm628, %v1704, 0
    %v1911 = vsel %vm628, %v1709, 0
    %v1914 = vsel %vm628, %v1714, 0
    %v1917 = vsel %vm628, %v1719, 0
    %v1920 = vsel %vm628, %v1789, 0
    %v1923 = vsel %vm628, %v1794, 0
    %v1926 = vsel %vm628, %v1799, 0
    %v1929 = vsel %vm628, %v1804, 0
    %v1932 = vsel %vm628, %v1809, 0
    %v1935 = vsel %vm628, %v1814, 0
    %v1938 = vsel %vm628, %v1819, 0
    %v1941 = vsel %vm628, %v1824, 0
    %v1944 = vsel %vm628, %v1829, 0
    %v1947 = vsel %vm628, %v1834, 0
    %v1950 = vsel %vm628, %v1839, 0
    %v1953 = vsel %vm628, %v1844, 0
    %v1956 = vsel %vm628, %v1849, 0
    %v1959 = vsel %vm628, %v1854, 0
    %v1962 = vsel %vm628, %v1859, 0
    %v1965 = vsel %vm628, %v1864, 0
    %1967 = vmatprep.subr.mxu0 0.0
    %1968 = vmatpush1.msra.mxu0 %v1572
    %1969 = vmatprep.subr.mxu0 0.0
    %1970 = vmatpush1.msra.mxu0 %v1573
    %1971 = vmatprep.subr.mxu0 0.0
    %1972 = vmatpush1.msra.mxu0 %v1574
    %1973 = vmatprep.subr.mxu0 0.0
    %1974 = vmatpush1.msra.mxu0 %v1575
    %1975 = vmatprep.subr.mxu0 0.0
    %1976 = vmatpush1.msra.mxu0 0.0
    %1977 = vmatprep.subr.mxu0 0.0
    %1978 = vmatpush1.msra.mxu0 0.0
    %1979 = vmatprep.subr.mxu0 0.0
    %1980 = vmatpush1.msra.mxu0 0.0
    %1981 = vmatprep.subr.mxu0 0.0
    %1982 = vmatpush1.msra.mxu0 0.0
    %1983 = vmatprep.subr.mxu0 0.0
    %1984 = vmatpush1.msra.mxu0 0.0
    %1985 = vmatprep.subr.mxu0 0.0
    %1986 = vmatpush1.msra.mxu0 0.0
    %1987 = vmatprep.subr.mxu0 0.0
    %1988 = vmatpush1.msra.mxu0 0.0
    %1989 = vmatprep.subr.mxu0 0.0
    %1990 = vmatpush1.msra.mxu0 0.0
    %1991 = vmatprep.subr.mxu0 0.0
    %1992 = vmatpush1.msra.mxu0 0.0
    %1993 = vmatprep.subr.mxu0 0.0
    %1994 = vmatpush1.msra.mxu0 0.0
    %1995 = vmatprep.subr.mxu0 0.0
    %1996 = vmatpush1.msra.mxu0 0.0
    %1997 = vmatprep.subr.mxu0 0.0
    %1998 = vmatpush1.msra.mxu0 0.0
    %1999 = vmatprep.subr.mxu0 0.0
    %2000 = vmatpush1.msra.mxu0 0.0
    %2001 = vmatprep.subr.mxu0 0.0
    %2002 = vmatpush1.msra.mxu0 0.0
    %2003 = vmatprep.subr.mxu0 0.0
    %2004 = vmatpush1.msra.mxu0 0.0
    %2005 = vmatprep.subr.mxu0 0.0
    %2006 = vmatpush1.msra.mxu0 0.0
    %2007 = vmatprep.subr.mxu0 0.0
    %2008 = vmatpush1.msra.mxu0 0.0
    %2009 = vmatprep.subr.mxu0 0.0
    %2010 = vmatpush1.msra.mxu0 0.0
    %2011 = vmatprep.subr.mxu0 0.0
    %2012 = vmatpush1.msra.mxu0 0.0
    %2013 = vmatprep.subr.mxu0 0.0
    %2014 = vmatpush1.msra.mxu0 0.0
    %2015 = vmatprep.subr.mxu0 0.0
    %2016 = vmatpush1.msra.mxu0 0.0
    %2017 = vmatprep.subr.mxu0 0.0
    %2018 = vmatpush1.msra.mxu0 0.0
    %2019 = vmatprep.subr.mxu0 0.0
    %2020 = vmatpush1.msra.mxu0 0.0
    %2021 = vmatprep.subr.mxu0 0.0
    %2022 = vmatpush1.msra.mxu0 0.0
    %2023 = vmatprep.subr.mxu0 0.0
    %2024 = vmatpush1.msra.mxu0 0.0
    %2025 = vmatprep.subr.mxu0 0.0
    %2026 = vmatpush1.msra.mxu0 0.0
    %2027 = vmatprep.subr.mxu0 0.0
    %2028 = vmatpush1.msra.mxu0 0.0
    %2029 = vmatprep.subr.mxu0 0.0
    %2030 = vmatpush1.msra.mxu0 0.0
    %2031 = vmatprep.mubr.f32.mxu0 0.0
    %2032 = vmatmul.mubr.f32.gmra.mrb[0].mxu0 %v1872
    %v2033 = vpop.f32.mrb[0].mxu0
    %v2034 = vadd.f32 %v1870, %v2033
    %v2035 = vpop.f32.mrb[0].mxu0
    %2036 = vmatprep.mubr.f32.mxu0 0.0
    %2037 = vmatmul.mubr.f32.gmra.mrb[0].mxu0 %v1875
    %v2038 = vpop.f32.mrb[0].mxu0
    %v2039 = vadd.f32 %v1870, %v2038
    %v2040 = vpop.f32.mrb[0].mxu0
    %2041 = vmatprep.mubr.f32.mxu0 0.0
    %2042 = vmatmul.mubr.f32.gmra.mrb[0].mxu0 %v1878
    %v2043 = vpop.f32.mrb[0].mxu0
    %v2044 = vadd.f32 %v1870, %v2043
    %v2045 = vpop.f32.mrb[0].mxu0
    %2046 = vmatprep.mubr.f32.mxu0 0.0
    %2047 = vmatmul.mubr.f32.gmra.mrb[0].mxu0 %v1881
    %v2048 = vpop.f32.mrb[0].mxu0
    %v2049 = vadd.f32 %v1870, %v2048
    %v2050 = vpop.f32.mrb[0].mxu0
    %2051 = vmatprep.mubr.f32.mxu0 0.0
    %2052 = vmatmul.mubr.f32.gmra.mrb[0].mxu0 %v1884
    %v2053 = vpop.f32.mrb[0].mxu0
    %v2054 = vadd.f32 %v1870, %v2053
    %v2055 = vpop.f32.mrb[0].mxu0
    %2056 = vmatprep.mubr.f32.mxu0 0.0
    %2057 = vmatmul.mubr.f32.gmra.mrb[0].mxu0 %v1887
    %v2058 = vpop.f32.mrb[0].mxu0
    %v2059 = vadd.f32 %v1870, %v2058
    %v2060 = vpop.f32.mrb[0].mxu0
    %2061 = vmatprep.mubr.f32.mxu0 0.0
    %2062 = vmatmul.mubr.f32.gmra.mrb[0].mxu0 %v1890
    %v2063 = vpop.f32.mrb[0].mxu0
    %v2064 = vadd.f32 %v1870, %v2063
    %v2065 = vpop.f32.mrb[0].mxu0
    %2066 = vmatprep.mubr.f32.mxu0 0.0
    %2067 = vmatmul.mubr.f32.gmra.mrb[0].mxu0 %v1893
    %v2068 = vpop.f32.mrb[0].mxu0
    %v2069 = vadd.f32 %v1870, %v2068
    %v2070 = vpop.f32.mrb[0].mxu0
    %2071 = vmatprep.mubr.f32.mxu0 0.0
    %2072 = vmatmul.mubr.f32.gmra.mrb[0].mxu0 %v1896
    %v2073 = vpop.f32.mrb[0].mxu0
    %v2074 = vadd.f32 %v1870, %v2073
    %v2075 = vpop.f32.mrb[0].mxu0
    %2076 = vmatprep.mubr.f32.mxu0 0.0
    %2077 = vmatmul.mubr.f32.gmra.mrb[0].mxu0 %v1899
    %v2078 = vpop.f32.mrb[0].mxu0
    %v2079 = vadd.f32 %v1870, %v2078
    %v2080 = vpop.f32.mrb[0].mxu0
    %2081 = vmatprep.mubr.f32.mxu0 0.0
    %2082 = vmatmul.mubr.f32.gmra.mrb[0].mxu0 %v1902
    %v2083 = vpop.f32.mrb[0].mxu0
    %v2084 = vadd.f32 %v1870, %v2083
    %v2085 = vpop.f32.mrb[0].mxu0
    %2086 = vmatprep.mubr.f32.mxu0 0.0
    %2087 = vmatmul.mubr.f32.gmra.mrb[0].mxu0 %v1905
    %v2088 = vpop.f32.mrb[0].mxu0
    %v2089 = vadd.f32 %v1870, %v2088
    %v2090 = vpop.f32.mrb[0].mxu0
    %2091 = vmatprep.mubr.f32.mxu0 0.0
    %2092 = vmatmul.mubr.f32.gmra.mrb[0].mxu0 %v1908
    %v2093 = vpop.f32.mrb[0].mxu0
    %v2094 = vadd.f32 %v1870, %v2093
    %v2095 = vpop.f32.mrb[0].mxu0
    %2096 = vmatprep.mubr.f32.mxu0 0.0
    %2097 = vmatmul.mubr.f32.gmra.mrb[0].mxu0 %v1911
    %v2098 = vpop.f32.mrb[0].mxu0
    %v2099 = vadd.f32 %v1870, %v2098
    %v2100 = vpop.f32.mrb[0].mxu0
    %2101 = vmatprep.mubr.f32.mxu0 0.0
    %2102 = vmatmul.mubr.f32.gmra.mrb[0].mxu0 %v1914
    %v2103 = vpop.f32.mrb[0].mxu0
    %v2104 = vadd.f32 %v1870, %v2103
    %v2105 = vpop.f32.mrb[0].mxu0
    %2106 = vmatprep.mubr.f32.mxu0 0.0
    %2107 = vmatmul.mubr.f32.gmra.mrb[0].mxu0 %v1917
    %v2108 = vpop.f32.mrb[0].mxu0
    %v2109 = vadd.f32 %v1870, %v2108
    %v2110 = vpop.f32.mrb[0].mxu0
    %2111 = vmatprep.mubr.f32.mxu0 0.0
    %2112 = vmatmul.mubr.f32.gmra.mrb[0].mxu0 %v1920
    %v2113 = vpop.f32.mrb[0].mxu0
    %v2114 = vadd.f32 %v1870, %v2113
    %v2115 = vpop.f32.mrb[0].mxu0
    %2116 = vmatprep.mubr.f32.mxu0 0.0
    %2117 = vmatmul.mubr.f32.gmra.mrb[0].mxu0 %v1923
    %v2118 = vpop.f32.mrb[0].mxu0
    %v2119 = vadd.f32 %v1870, %v2118
    %v2120 = vpop.f32.mrb[0].mxu0
    %2121 = vmatprep.mubr.f32.mxu0 0.0
    %2122 = vmatmul.mubr.f32.gmra.mrb[0].mxu0 %v1926
    %v2123 = vpop.f32.mrb[0].mxu0
    %v2124 = vadd.f32 %v1870, %v2123
    %v2125 = vpop.f32.mrb[0].mxu0
    %2126 = vmatprep.mubr.f32.mxu0 0.0
    %2127 = vmatmul.mubr.f32.gmra.mrb[0].mxu0 %v1929
    %v2128 = vpop.f32.mrb[0].mxu0
    %v2129 = vadd.f32 %v1870, %v2128
    %v2130 = vpop.f32.mrb[0].mxu0
    %2131 = vmatprep.mubr.f32.mxu0 0.0
    %2132 = vmatmul.mubr.f32.gmra.mrb[0].mxu0 %v1932
    %v2133 = vpop.f32.mrb[0].mxu0
    %v2134 = vadd.f32 %v1870, %v2133
    %v2135 = vpop.f32.mrb[0].mxu0
    %2136 = vmatprep.mubr.f32.mxu0 0.0
    %2137 = vmatmul.mubr.f32.gmra.mrb[0].mxu0 %v1935
    %v2138 = vpop.f32.mrb[0].mxu0
    %v2139 = vadd.f32 %v1870, %v2138
    %v2140 = vpop.f32.mrb[0].mxu0
    %2141 = vmatprep.mubr.f32.mxu0 0.0
    %2142 = vmatmul.mubr.f32.gmra.mrb[0].mxu0 %v1938
    %v2143 = vpop.f32.mrb[0].mxu0
    %v2144 = vadd.f32 %v1870, %v2143
    %v2145 = vpop.f32.mrb[0].mxu0
    %2146 = vmatprep.mubr.f32.mxu0 0.0
    %2147 = vmatmul.mubr.f32.gmra.mrb[0].mxu0 %v1941
    %v2148 = vpop.f32.mrb[0].mxu0
    %v2149 = vadd.f32 %v1870, %v2148
    %v2150 = vpop.f32.mrb[0].mxu0
    %2151 = vmatprep.mubr.f32.mxu0 0.0
    %2152 = vmatmul.mubr.f32.gmra.mrb[0].mxu0 %v1944
    %v2153 = vpop.f32.mrb[0].mxu0
    %v2154 = vadd.f32 %v1870, %v2153
    %v2155 = vpop.f32.mrb[0].mxu0
    %2156 = vmatprep.mubr.f32.mxu0 0.0
    %2157 = vmatmul.mubr.f32.gmra.mrb[0].mxu0 %v1947
    %v2158 = vpop.f32.mrb[0].mxu0
    %v2159 = vadd.f32 %v1870, %v2158
    %v2160 = vpop.f32.mrb[0].mxu0
    %2161 = vmatprep.mubr.f32.mxu0 0.0
    %2162 = vmatmul.mubr.f32.gmra.mrb[0].mxu0 %v1950
    %v2163 = vpop.f32.mrb[0].mxu0
    %v2164 = vadd.f32 %v1870, %v2163
    %v2165 = vpop.f32.mrb[0].mxu0
    %2166 = vmatprep.mubr.f32.mxu0 0.0
    %2167 = vmatmul.mubr.f32.gmra.mrb[0].mxu0 %v1953
    %v2168 = vpop.f32.mrb[0].mxu0
    %v2169 = vadd.f32 %v1870, %v2168
    %v2170 = vpop.f32.mrb[0].mxu0
    %2171 = vmatprep.mubr.f32.mxu0 0.0
    %2172 = vmatmul.mubr.f32.gmra.mrb[0].mxu0 %v1956
    %v2173 = vpop.f32.mrb[0].mxu0
    %v2174 = vadd.f32 %v1870, %v2173
    %v2175 = vpop.f32.mrb[0].mxu0
    %2176 = vmatprep.mubr.f32.mxu0 0.0
    %2177 = vmatmul.mubr.f32.gmra.mrb[0].mxu0 %v1959
    %v2178 = vpop.f32.mrb[0].mxu0
    %v2179 = vadd.f32 %v1870, %v2178
    %v2180 = vpop.f32.mrb[0].mxu0
    %2181 = vmatprep.mubr.f32.mxu0 0.0
    %2182 = vmatmul.mubr.f32.gmra.mrb[0].mxu0 %v1962
    %v2183 = vpop.f32.mrb[0].mxu0
    %v2184 = vadd.f32 %v1870, %v2183
    %v2185 = vpop.f32.mrb[0].mxu0
    %2186 = vmatprep.mubr.f32.mxu0 0.0
    %2187 = vmatmul.mubr.f32.gmra.mrb[0].mxu0 %v1965
    %v2188 = vpop.f32.mrb[0].mxu0
    %v2189 = vadd.f32 %v1870, %v2188
    %v2190 = vpop.f32.mrb[0].mxu0
    %2191 = vdwg.mxu0
    %2224 = vrot.lane.b32.xlu0 %v1413, 32
    %v2225 = vpop.permute.xlu0 %2224
    %2226 = vrot.lane.b32.xlu0 %v1418, 32
    %v2227 = vpop.permute.xlu0 %2226
    %2228 = vrot.lane.b32.xlu0 %v1423, 32
    %v2229 = vpop.permute.xlu0 %2228
    %2230 = vrot.lane.b32.xlu0 %v1428, 32
    %v2231 = vpop.permute.xlu0 %2230
    %2232 = vrot.lane.b32.xlu0 %v1433, 32
    %v2233 = vpop.permute.xlu0 %2232
    %2234 = vrot.lane.b32.xlu0 %v1438, 32
    %v2235 = vpop.permute.xlu0 %2234
    %2236 = vrot.lane.b32.xlu0 %v1443, 32
    %v2237 = vpop.permute.xlu0 %2236
    %2238 = vrot.lane.b32.xlu0 %v1448, 32
    %v2239 = vpop.permute.xlu0 %2238
    %2240 = vrot.lane.b32.xlu0 %v1453, 32
    %v2241 = vpop.permute.xlu0 %2240
    %2242 = vrot.lane.b32.xlu0 %v1458, 32
    %v2243 = vpop.permute.xlu0 %2242
    %2244 = vrot.lane.b32.xlu0 %v1463, 32
    %v2245 = vpop.permute.xlu0 %2244
    %2246 = vrot.lane.b32.xlu0 %v1468, 32
    %v2247 = vpop.permute.xlu0 %2246
    %2248 = vrot.lane.b32.xlu0 %v1473, 32
    %v2249 = vpop.permute.xlu0 %2248
    %2250 = vrot.lane.b32.xlu0 %v1478, 32
    %v2251 = vpop.permute.xlu0 %2250
    %2252 = vrot.lane.b32.xlu0 %v1483, 32
    %v2253 = vpop.permute.xlu0 %2252
    %2254 = vrot.lane.b32.xlu0 %v1488, 32
    %v2255 = vpop.permute.xlu0 %2254
    %2256 = vrot.lane.b32.xlu0 %v1493, 32
    %v2257 = vpop.permute.xlu0 %2256
    %2258 = vrot.lane.b32.xlu0 %v1498, 32
    %v2259 = vpop.permute.xlu0 %2258
    %2260 = vrot.lane.b32.xlu0 %v1503, 32
    %v2261 = vpop.permute.xlu0 %2260
    %2262 = vrot.lane.b32.xlu0 %v1508, 32
    %v2263 = vpop.permute.xlu0 %2262
    %2264 = vrot.lane.b32.xlu0 %v1513, 32
    %v2265 = vpop.permute.xlu0 %2264
    %2266 = vrot.lane.b32.xlu0 %v1518, 32
    %v2267 = vpop.permute.xlu0 %2266
    %2268 = vrot.lane.b32.xlu0 %v1523, 32
    %v2269 = vpop.permute.xlu0 %2268
    %2270 = vrot.lane.b32.xlu0 %v1528, 32
    %v2271 = vpop.permute.xlu0 %2270
    %2272 = vrot.lane.b32.xlu0 %v1533, 32
    %v2273 = vpop.permute.xlu0 %2272
    %2274 = vrot.lane.b32.xlu0 %v1538, 32
    %v2275 = vpop.permute.xlu0 %2274
    %2276 = vrot.lane.b32.xlu0 %v1543, 32
    %v2277 = vpop.permute.xlu0 %2276
    %2278 = vrot.lane.b32.xlu0 %v1548, 32
    %v2279 = vpop.permute.xlu0 %2278
    %2280 = vrot.lane.b32.xlu0 %v1553, 32
    %v2281 = vpop.permute.xlu0 %2280
    %2282 = vrot.lane.b32.xlu0 %v1558, 32
    %v2283 = vpop.permute.xlu0 %2282
    %2284 = vrot.lane.b32.xlu0 %v1563, 32
    %v2285 = vpop.permute.xlu0 %2284
    %2286 = vrot.lane.b32.xlu0 %v1568, 32
    %v2287 = vpop.permute.xlu0 %2286
    %2352 = vrot.lane.b32.xlu0 %v2034, 64
    %v2353 = vpop.permute.xlu0 %2352
    %2354 = vrot.lane.b32.xlu0 %v2039, 64
    %v2355 = vpop.permute.xlu0 %2354
    %2356 = vrot.lane.b32.xlu0 %v2044, 64
    %v2357 = vpop.permute.xlu0 %2356
    %2358 = vrot.lane.b32.xlu0 %v2049, 64
    %v2359 = vpop.permute.xlu0 %2358
    %2360 = vrot.lane.b32.xlu0 %v2054, 64
    %v2361 = vpop.permute.xlu0 %2360
    %2362 = vrot.lane.b32.xlu0 %v2059, 64
    %v2363 = vpop.permute.xlu0 %2362
    %2364 = vrot.lane.b32.xlu0 %v2064, 64
    %v2365 = vpop.permute.xlu0 %2364
    %2366 = vrot.lane.b32.xlu0 %v2069, 64
    %v2367 = vpop.permute.xlu0 %2366
    %2368 = vrot.lane.b32.xlu0 %v2074, 64
    %v2369 = vpop.permute.xlu0 %2368
    %2370 = vrot.lane.b32.xlu0 %v2079, 64
    %v2371 = vpop.permute.xlu0 %2370
    %2372 = vrot.lane.b32.xlu0 %v2084, 64
    %v2373 = vpop.permute.xlu0 %2372
    %2374 = vrot.lane.b32.xlu0 %v2089, 64
    %v2375 = vpop.permute.xlu0 %2374
    %2376 = vrot.lane.b32.xlu0 %v2094, 64
    %v2377 = vpop.permute.xlu0 %2376
    %2378 = vrot.lane.b32.xlu0 %v2099, 64
    %v2379 = vpop.permute.xlu0 %2378
    %2380 = vrot.lane.b32.xlu0 %v2104, 64
    %v2381 = vpop.permute.xlu0 %2380
    %2382 = vrot.lane.b32.xlu0 %v2109, 64
    %v2383 = vpop.permute.xlu0 %2382
    %2384 = vrot.lane.b32.xlu0 %v2114, 64
    %v2385 = vpop.permute.xlu0 %2384
    %2386 = vrot.lane.b32.xlu0 %v2119, 64
    %v2387 = vpop.permute.xlu0 %2386
    %2388 = vrot.lane.b32.xlu0 %v2124, 64
    %v2389 = vpop.permute.xlu0 %2388
    %2390 = vrot.lane.b32.xlu0 %v2129, 64
    %v2391 = vpop.permute.xlu0 %2390
    %2392 = vrot.lane.b32.xlu0 %v2134, 64
    %v2393 = vpop.permute.xlu0 %2392
    %2394 = vrot.lane.b32.xlu0 %v2139, 64
    %v2395 = vpop.permute.xlu0 %2394
    %2396 = vrot.lane.b32.xlu0 %v2144, 64
    %v2397 = vpop.permute.xlu0 %2396
    %2398 = vrot.lane.b32.xlu0 %v2149, 64
    %v2399 = vpop.permute.xlu0 %2398
    %2400 = vrot.lane.b32.xlu0 %v2154, 64
    %v2401 = vpop.permute.xlu0 %2400
    %2402 = vrot.lane.b32.xlu0 %v2159, 64
    %v2403 = vpop.permute.xlu0 %2402
    %2404 = vrot.lane.b32.xlu0 %v2164, 64
    %v2405 = vpop.permute.xlu0 %2404
    %2406 = vrot.lane.b32.xlu0 %v2169, 64
    %v2407 = vpop.permute.xlu0 %2406
    %2408 = vrot.lane.b32.xlu0 %v2174, 64
    %v2409 = vpop.permute.xlu0 %2408
    %2410 = vrot.lane.b32.xlu0 %v2179, 64
    %v2411 = vpop.permute.xlu0 %2410
    %2412 = vrot.lane.b32.xlu0 %v2184, 64
    %v2413 = vpop.permute.xlu0 %2412
    %2414 = vrot.lane.b32.xlu0 %v2189, 64
    %v2415 = vpop.permute.xlu0 %2414
    %v2448 = vsel %vm628, %v792, %v2225
    %v2449 = vsel %vm628, %v797, %v2227
    %v2450 = vsel %vm628, %v802, %v2229
    %v2451 = vsel %vm628, %v807, %v2231
    %v2452 = vsel %vm628, %v812, %v2233
    %v2453 = vsel %vm628, %v817, %v2235
    %v2454 = vsel %vm628, %v822, %v2237
    %v2455 = vsel %vm628, %v827, %v2239
    %v2456 = vsel %vm628, %v832, %v2241
    %v2457 = vsel %vm628, %v837, %v2243
    %v2458 = vsel %vm628, %v842, %v2245
    %v2459 = vsel %vm628, %v847, %v2247
    %v2460 = vsel %vm628, %v852, %v2249
    %v2461 = vsel %vm628, %v857, %v2251
    %v2462 = vsel %vm628, %v862, %v2253
    %v2463 = vsel %vm628, %v867, %v2255
    %v2464 = vsel %vm628, %v872, %v2257
    %v2465 = vsel %vm628, %v877, %v2259
    %v2466 = vsel %vm628, %v882, %v2261
    %v2467 = vsel %vm628, %v887, %v2263
    %v2468 = vsel %vm628, %v892, %v2265
    %v2469 = vsel %vm628, %v897, %v2267
    %v2470 = vsel %vm628, %v902, %v2269
    %v2471 = vsel %vm628, %v907, %v2271
    %v2472 = vsel %vm628, %v912, %v2273
    %v2473 = vsel %vm628, %v917, %v2275
    %v2474 = vsel %vm628, %v922, %v2277
    %v2475 = vsel %vm628, %v927, %v2279
    %v2476 = vsel %vm628, %v932, %v2281
    %v2477 = vsel %vm628, %v937, %v2283
    %v2478 = vsel %vm628, %v942, %v2285
    %v2479 = vsel %vm628, %v947, %v2287
    %vm2480 = vcmask 523264
    %v2481 = vsel %vm2480, %v2448, %v2353
    %v2482 = vsel %vm2480, %v2449, %v2355
    %v2483 = vsel %vm2480, %v2450, %v2357
    %v2484 = vsel %vm2480, %v2451, %v2359
    %v2485 = vsel %vm2480, %v2452, %v2361
    %v2486 = vsel %vm2480, %v2453, %v2363
    %v2487 = vsel %vm2480, %v2454, %v2365
    %v2488 = vsel %vm2480, %v2455, %v2367
    %v2489 = vsel %vm2480, %v2456, %v2369
    %v2490 = vsel %vm2480, %v2457, %v2371
    %v2491 = vsel %vm2480, %v2458, %v2373
    %v2492 = vsel %vm2480, %v2459, %v2375
    %v2493 = vsel %vm2480, %v2460, %v2377
    %v2494 = vsel %vm2480, %v2461, %v2379
    %v2495 = vsel %vm2480, %v2462, %v2381
    %v2496 = vsel %vm2480, %v2463, %v2383
    %v2497 = vsel %vm2480, %v2464, %v2385
    %v2498 = vsel %vm2480, %v2465, %v2387
    %v2499 = vsel %vm2480, %v2466, %v2389
    %v2500 = vsel %vm2480, %v2467, %v2391
    %v2501 = vsel %vm2480, %v2468, %v2393
    %v2502 = vsel %vm2480, %v2469, %v2395
    %v2503 = vsel %vm2480, %v2470, %v2397
    %v2504 = vsel %vm2480, %v2471, %v2399
    %v2505 = vsel %vm2480, %v2472, %v2401
    %v2506 = vsel %vm2480, %v2473, %v2403
    %v2507 = vsel %vm2480, %v2474, %v2405
    %v2508 = vsel %vm2480, %v2475, %v2407
    %v2509 = vsel %vm2480, %v2476, %v2409
    %v2510 = vsel %vm2480, %v2477, %v2411
    %v2511 = vsel %vm2480, %v2478, %v2413
    %v2512 = vsel %vm2480, %v2479, %v2415
    %2513 = vmatprep.subr.mxu0 0.0
    %2514 = vmatpush1.msra.mxu0 %v2481
    %2515 = vmatprep.subr.mxu0 0.0
    %2516 = vmatpush1.msra.mxu0 %v2482
    %2517 = vmatprep.subr.mxu0 0.0
    %2518 = vmatpush1.msra.mxu0 %v2483
    %2519 = vmatprep.subr.mxu0 0.0
    %2520 = vmatpush1.msra.mxu0 %v2484
    %2521 = vmatprep.subr.mxu0 0.0
    %2522 = vmatpush1.msra.mxu0 %v2485
    %2523 = vmatprep.subr.mxu0 0.0
    %2524 = vmatpush1.msra.mxu0 %v2486
    %2525 = vmatprep.subr.mxu0 0.0
    %2526 = vmatpush1.msra.mxu0 %v2487
    %2527 = vmatprep.subr.mxu0 0.0
    %2528 = vmatpush1.msra.mxu0 %v2488
    %2529 = vmatprep.subr.mxu0 0.0
    %2530 = vmatpush1.msra.mxu0 %v2489
    %2531 = vmatprep.subr.mxu0 0.0
    %2532 = vmatpush1.msra.mxu0 %v2490
    %2533 = vmatprep.subr.mxu0 0.0
    %2534 = vmatpush1.msra.mxu0 %v2491
    %2535 = vmatprep.subr.mxu0 0.0
    %2536 = vmatpush1.msra.mxu0 %v2492
    %2537 = vmatprep.subr.mxu0 0.0
    %2538 = vmatpush1.msra.mxu0 %v2493
    %2539 = vmatprep.subr.mxu0 0.0
    %2540 = vmatpush1.msra.mxu0 %v2494
    %2541 = vmatprep.subr.mxu0 0.0
    %2542 = vmatpush1.msra.mxu0 %v2495
    %2543 = vmatprep.subr.mxu0 0.0
    %2544 = vmatpush1.msra.mxu0 %v2496
    %2545 = vmatprep.subr.mxu0 0.0
    %2546 = vmatpush1.msra.mxu0 %v2497
    %2547 = vmatprep.subr.mxu0 0.0
    %2548 = vmatpush1.msra.mxu0 %v2498
    %2549 = vmatprep.subr.mxu0 0.0
    %2550 = vmatpush1.msra.mxu0 %v2499
    %2551 = vmatprep.subr.mxu0 0.0
    %2552 = vmatpush1.msra.mxu0 %v2500
    %2553 = vmatprep.subr.mxu0 0.0
    %2554 = vmatpush1.msra.mxu0 %v2501
    %2555 = vmatprep.subr.mxu0 0.0
    %2556 = vmatpush1.msra.mxu0 %v2502
    %2557 = vmatprep.subr.mxu0 0.0
    %2558 = vmatpush1.msra.mxu0 %v2503
    %2559 = vmatprep.subr.mxu0 0.0
    %2560 = vmatpush1.msra.mxu0 %v2504
    %2561 = vmatprep.subr.mxu0 0.0
    %2562 = vmatpush1.msra.mxu0 %v2505
    %2563 = vmatprep.subr.mxu0 0.0
    %2564 = vmatpush1.msra.mxu0 %v2506
    %2565 = vmatprep.subr.mxu0 0.0
    %2566 = vmatpush1.msra.mxu0 %v2507
    %2567 = vmatprep.subr.mxu0 0.0
    %2568 = vmatpush1.msra.mxu0 %v2508
    %2569 = vmatprep.subr.mxu0 0.0
    %2570 = vmatpush1.msra.mxu0 %v2509
    %2571 = vmatprep.subr.mxu0 0.0
    %2572 = vmatpush1.msra.mxu0 %v2510
    %2573 = vmatprep.subr.mxu0 0.0
    %2574 = vmatpush1.msra.mxu0 %v2511
    %2575 = vmatprep.subr.mxu0 0.0
    %2576 = vmatpush1.msra.mxu0 %v2512
    %2577 = vmatprep.mubr.f32.mxu0 %v57
    %2578 = vmatmul.mubr.f32.gmra.mrb[0].mxu0 %v56
    %v2579 = vpop.f32.mrb[0].mxu0
    %v2580 = vadd.f32 0.0, %v2579
    %v2581 = vpop.f32.mrb[0].mxu0
    %2582 = vmatprep.mubr.f32.mxu0 %v59
    %2583 = vmatmul.mubr.f32.gmra.mrb[0].mxu0 %v58
    %v2584 = vpop.f32.mrb[0].mxu0
    %v2585 = vadd.f32 0.0, %v2584
    %v2586 = vpop.f32.mrb[0].mxu0
    %2587 = vdwg.mxu0
    %v2588 = vmax.f32 %v2580, 0.0
    %v2589 = vmax.f32 %v2585, 0.0
    %v2590 = vld [vmem:[%s4] sm:$0xff]
    %v2591 = vld [vmem:[%s4 + $0x8] sm:$0xff]
    %v2592 = vld [vmem:[%s4 + $0x10] sm:$0xff]
    %v2593 = vld [vmem:[%s4 + $0x18] sm:$0xff]
    %v2594 = vld [vmem:[%s4 + $0x20] sm:$0xff]
    %v2595 = vld [vmem:[%s4 + $0x28] sm:$0xff]
    %v2596 = vld [vmem:[%s4 + $0x30] sm:$0xff]
    %v2597 = vld [vmem:[%s4 + $0x38] sm:$0xff]
    %v2598 = vld [vmem:[%s4 + $0x40] sm:$0xff]
    %v2599 = vld [vmem:[%s4 + $0x48] sm:$0xff]
    %v2600 = vld [vmem:[%s4 + $0x50] sm:$0xff]
    %v2601 = vld [vmem:[%s4 + $0x58] sm:$0xff]
    %v2602 = vld [vmem:[%s4 + $0x60] sm:$0x1]
    %v2603 = vlaneseq
    %v2604 = vshrl.u32 %v2603, 7
    %v2605 = vsub.s32 0, %v2604
    %v2606 = vrot.slane %v2602, %v2605
    %vm2607 = vcmask 785408
    %v2609 = vsel %vm2607, %v2588, 0
    %v2612 = vsel %vm2607, %v2589, 0
    %2614 = vmatprep.subr.mxu0 0.0
    %2615 = vmatpush1.msra.mxu0 %v2590
    %2616 = vmatprep.subr.mxu0 0.0
    %2617 = vmatpush1.msra.mxu0 %v2591
    %2618 = vmatprep.subr.mxu0 0.0
    %2619 = vmatpush1.msra.mxu0 %v2592
    %2620 = vmatprep.subr.mxu0 0.0
    %2621 = vmatpush1.msra.mxu0 %v2593
    %2622 = vmatprep.subr.mxu0 0.0
    %2623 = vmatpush1.msra.mxu0 %v2594
    %2624 = vmatprep.subr.mxu0 0.0
    %2625 = vmatpush1.msra.mxu0 %v2595
    %2626 = vmatprep.subr.mxu0 0.0
    %2627 = vmatpush1.msra.mxu0 %v2596
    %2628 = vmatprep.subr.mxu0 0.0
    %2629 = vmatpush1.msra.mxu0 %v2597
    %2630 = vmatprep.subr.mxu0 0.0
    %2631 = vmatpush1.msra.mxu0 %v2598
    %2632 = vmatprep.subr.mxu0 0.0
    %2633 = vmatpush1.msra.mxu0 %v2599
    %2634 = vmatprep.subr.mxu0 0.0
    %2635 = vmatpush1.msra.mxu0 %v2600
    %2636 = vmatprep.subr.mxu0 0.0
    %2637 = vmatpush1.msra.mxu0 %v2601
    %2638 = vmatprep.subr.mxu0 0.0
    %2639 = vmatpush1.msra.mxu0 0.0
    %2640 = vmatprep.subr.mxu0 0.0
    %2641 = vmatpush1.msra.mxu0 0.0
    %2642 = vmatprep.subr.mxu0 0.0
    %2643 = vmatpush1.msra.mxu0 0.0
    %2644 = vmatprep.subr.mxu0 0.0
    %2645 = vmatpush1.msra.mxu0 0.0
    %2646 = vmatprep.subr.mxu0 0.0
    %2647 = vmatpush1.msra.mxu0 0.0
    %2648 = vmatprep.subr.mxu0 0.0
    %2649 = vmatpush1.msra.mxu0 0.0
    %2650 = vmatprep.subr.mxu0 0.0
    %2651 = vmatpush1.msra.mxu0 0.0
    %2652 = vmatprep.subr.mxu0 0.0
    %2653 = vmatpush1.msra.mxu0 0.0
    %2654 = vmatprep.subr.mxu0 0.0
    %2655 = vmatpush1.msra.mxu0 0.0
    %2656 = vmatprep.subr.mxu0 0.0
    %2657 = vmatpush1.msra.mxu0 0.0
    %2658 = vmatprep.subr.mxu0 0.0
    %2659 = vmatpush1.msra.mxu0 0.0
    %2660 = vmatprep.subr.mxu0 0.0
    %2661 = vmatpush1.msra.mxu0 0.0
    %2662 = vmatprep.subr.mxu0 0.0
    %2663 = vmatpush1.msra.mxu0 0.0
    %2664 = vmatprep.subr.mxu0 0.0
    %2665 = vmatpush1.msra.mxu0 0.0
    %2666 = vmatprep.subr.mxu0 0.0
    %2667 = vmatpush1.msra.mxu0 0.0
    %2668 = vmatprep.subr.mxu0 0.0
    %2669 = vmatpush1.msra.mxu0 0.0
    %2670 = vmatprep.subr.mxu0 0.0
    %2671 = vmatpush1.msra.mxu0 0.0
    %2672 = vmatprep.subr.mxu0 0.0
    %2673 = vmatpush1.msra.mxu0 0.0
    %2674 = vmatprep.subr.mxu0 0.0
    %2675 = vmatpush1.msra.mxu0 0.0
    %2676 = vmatprep.subr.mxu0 0.0
    %2677 = vmatpush1.msra.mxu0 0.0
    %2678 = vmatprep.mubr.f32.mxu0 0.0
    %2679 = vmatmul.mubr.f32.gmra.mrb[0].mxu0 %v2609
    %v2680 = vpop.f32.mrb[0].mxu0
    %v2681 = vadd.f32 %v2606, %v2680
    %v2682 = vpop.f32.mrb[0].mxu0
    %2683 = vmatprep.mubr.f32.mxu0 0.0
    %2684 = vmatmul.mubr.f32.gmra.mrb[0].mxu0 %v2612
    %v2685 = vpop.f32.mrb[0].mxu0
    %v2686 = vadd.f32 %v2606, %v2685
    %v2687 = vpop.f32.mrb[0].mxu0
    %2688 = vdwg.mxu0
    %v2689 = vmax.f32 %v2681, 0.0
    %v2690 = vmax.f32 %v2686, 0.0
    %v2691 = vld [vmem:[%s5] sm:$0xff]
    %v2692 = vld [vmem:[%s5 + $0x8] sm:$0x1]
    %v2693 = vlaneseq
    %v2694 = vshrl.u32 %v2693, 7
    %v2695 = vsub.s32 0, %v2694
    %v2696 = vrot.slane %v2692, %v2695
    %vm2697 = vcmask 64512
    %v2699 = vsel %vm2697, %v2689, 0
    %v2702 = vsel %vm2697, %v2690, 0
    %2704 = vmatprep.subr.mxu0 0.0
    %2705 = vmatpush1.msra.mxu0 %v2691
    %2706 = vmatprep.subr.mxu0 0.0
    %2707 = vmatpush1.msra.mxu0 0.0
    %2708 = vmatprep.subr.mxu0 0.0
    %2709 = vmatpush1.msra.mxu0 0.0
    %2710 = vmatprep.subr.mxu0 0.0
    %2711 = vmatpush1.msra.mxu0 0.0
    %2712 = vmatprep.subr.mxu0 0.0
    %2713 = vmatpush1.msra.mxu0 0.0
    %2714 = vmatprep.subr.mxu0 0.0
    %2715 = vmatpush1.msra.mxu0 0.0
    %2716 = vmatprep.subr.mxu0 0.0
    %2717 = vmatpush1.msra.mxu0 0.0
    %2718 = vmatprep.subr.mxu0 0.0
    %2719 = vmatpush1.msra.mxu0 0.0
    %2720 = vmatprep.subr.mxu0 0.0
    %2721 = vmatpush1.msra.mxu0 0.0
    %2722 = vmatprep.subr.mxu0 0.0
    %2723 = vmatpush1.msra.mxu0 0.0
    %2724 = vmatprep.subr.mxu0 0.0
    %2725 = vmatpush1.msra.mxu0 0.0
    %2726 = vmatprep.subr.mxu0 0.0
    %2727 = vmatpush1.msra.mxu0 0.0
    %2728 = vmatprep.subr.mxu0 0.0
    %2729 = vmatpush1.msra.mxu0 0.0
    %2730 = vmatprep.subr.mxu0 0.0
    %2731 = vmatpush1.msra.mxu0 0.0
    %2732 = vmatprep.subr.mxu0 0.0
    %2733 = vmatpush1.msra.mxu0 0.0
    %2734 = vmatprep.subr.mxu0 0.0
    %2735 = vmatpush1.msra.mxu0 0.0
    %2736 = vmatprep.subr.mxu0 0.0
    %2737 = vmatpush1.msra.mxu0 0.0
    %2738 = vmatprep.subr.mxu0 0.0
    %2739 = vmatpush1.msra.mxu0 0.0
    %2740 = vmatprep.subr.mxu0 0.0
    %2741 = vmatpush1.msra.mxu0 0.0
    %2742 = vmatprep.subr.mxu0 0.0
    %2743 = vmatpush1.msra.mxu0 0.0
    %2744 = vmatprep.subr.mxu0 0.0
    %2745 = vmatpush1.msra.mxu0 0.0
    %2746 = vmatprep.subr.mxu0 0.0
    %2747 = vmatpush1.msra.mxu0 0.0
    %2748 = vmatprep.subr.mxu0 0.0
    %2749 = vmatpush1.msra.mxu0 0.0
    %2750 = vmatprep.subr.mxu0 0.0
    %2751 = vmatpush1.msra.mxu0 0.0
    %2752 = vmatprep.subr.mxu0 0.0
    %2753 = vmatpush1.msra.mxu0 0.0
    %2754 = vmatprep.subr.mxu0 0.0
    %2755 = vmatpush1.msra.mxu0 0.0
    %2756 = vmatprep.subr.mxu0 0.0
    %2757 = vmatpush1.msra.mxu0 0.0
    %2758 = vmatprep.subr.mxu0 0.0
    %2759 = vmatpush1.msra.mxu0 0.0
    %2760 = vmatprep.subr.mxu0 0.0
    %2761 = vmatpush1.msra.mxu0 0.0
    %2762 = vmatprep.subr.mxu0 0.0
    %2763 = vmatpush1.msra.mxu0 0.0
    %2764 = vmatprep.subr.mxu0 0.0
    %2765 = vmatpush1.msra.mxu0 0.0
    %2766 = vmatprep.subr.mxu0 0.0
    %2767 = vmatpush1.msra.mxu0 0.0
    %2768 = vmatprep.mubr.f32.mxu0 0.0
    %2769 = vmatmul.mubr.f32.gmra.mrb[0].mxu0 %v2699
    %v2770 = vpop.f32.mrb[0].mxu0
    %v2771 = vadd.f32 %v2696, %v2770
    %v2772 = vpop.f32.mrb[0].mxu0
    %2773 = vmatprep.mubr.f32.mxu0 0.0
    %2774 = vmatmul.mubr.f32.gmra.mrb[0].mxu0 %v2702
    %v2775 = vpop.f32.mrb[0].mxu0
    %v2776 = vadd.f32 %v2696, %v2775
    %v2777 = vpop.f32.mrb[0].mxu0
    %2778 = vdwg.mxu0
    %v2779 = vtanh.pop %v2771
    %v2780 = vtanh.pop %v2776
    %2781 = vst [vmem:[#allocation2] sm:$0xff] %v2779
    %2782 = vst [vmem:[#allocation2 + $0x8] sm:$0xff] %v2780
    // Predicated region
    $region26: #{tpu_custom_call.1} parent=1 // pred_check
      _
    $region27: #{tpu_custom_call.1} parent=1 // pred_check_branch
      %2784 = sbr.rel (0) target = $region29
    $region28: #{tpu_custom_call.1} parent=1 // pred_region
      %s2786 = ssub.s32 256, 256
      %2787 = vsyncadd [#allocation3], %s2786
      %s2788 = sshll.u32 [#allocation2], 4
      %s2789 = int_to_ptr.vmem [resolvable:$true] %s2788
      %2794 = dma.vmem_to_hbm [thread:$0]  %s2789, 256, %s6, [#allocation3], 128, 128, 8
    $region29: #{tpu_custom_call.1} parent=1 // pred_fallthru
      _
    // Predicated region
    $region30: #{tpu_custom_call.1} parent=1 // pred_check
      _
    $region31: #{tpu_custom_call.1} parent=1 // pred_check_branch
      %2796 = sbr.rel (0) target = $region33
    $region32: #{tpu_custom_call.1} parent=1 // pred_region
      %2797 = dma.done [#allocation3], 256
    $region33: #{tpu_custom_call.1} parent=1 // pred_fallthru
      _
    %2798 = vsyncpa [#allocation3], 1

</llo_original>
